<compile_context>
chip_gen: v6e
topology: v6e:2x2x1
jax: 0.10.0
libtpu: 0.0.40
codegen_flags: <defaults>
</compile_context>

<pallas_src>
import functools

import jax
import jax.numpy as jnp
from jax.experimental import pallas as pl
from jax.experimental.pallas import tpu as pltpu


def _round_up(x, m):
    return (x + m - 1) // m * m


def _bottleneck_kernel(x_ref, w1_ref, b1_ref, w2_ref, b2_ref, w3_ref, b3_ref,
                       o_ref, pad_ref, *, NB, H, W, Cin, Cout, CM):
    M = NB * H * W

    x_bf = x_ref[...].reshape(M, Cin)                     # bf16 straight from HBM

    # ---- conv1 (1x1, BN1 scale folded into w1) + bias + ReLU ---------------
    h1 = jnp.dot(x_bf, w1_ref[...], preferred_element_type=jnp.float32)
    h1 = jnp.maximum(h1 + b1_ref[...], 0.0).astype(jnp.bfloat16)   # (M, CM)

    # ---- conv2 (3x3, stride=1, pad=1) as ONE bf16 im2col matmul ------------
    # bf16 halo scratch. The interior store starts at sublane offset 0 and
    # already carries the left/right zero columns; only the top/bottom halo
    # rows need a (tiny) explicit zero store each step. Columns >= W+2 of the
    # padded row pitch are never read, so they are left untouched.
    zc = jnp.zeros((NB, H, 1, CM), jnp.bfloat16)
    zr = jnp.zeros((NB, 1, W + 2, CM), jnp.bfloat16)
    interior = jnp.concatenate(
        [zc, h1.reshape(NB, H, W, CM), zc], axis=2)       # (NB, H, W+2, CM)
    pad_ref[:, 0:1, 0:W + 2, :] = zr
    pad_ref[:, H + 1:H + 2, 0:W + 2, :] = zr
    pad_ref[:, 1:H + 1, 0:W + 2, :] = interior

    taps = [pad_ref[:, dy:dy + H, dx:dx + W, :]
            for dy in range(3) for dx in range(3)]
    col = jnp.concatenate(taps, axis=-1).reshape(M, 9 * CM)       # bf16
    h2 = jnp.dot(col, w2_ref[...], preferred_element_type=jnp.float32)
    h2 = jnp.maximum(h2 + b2_ref[...], 0.0).astype(jnp.bfloat16)  # (M, CM)

    # ---- conv3 (1x1) + bias + residual add (f32) + ReLU --------------------
    h3 = jnp.dot(h2, w3_ref[...], preferred_element_type=jnp.float32)
    out = jnp.maximum(h3 + b3_ref[...] + x_bf.astype(jnp.float32), 0.0)
    o_ref[...] = out.reshape(NB, H, W, Cout).astype(o_ref.dtype)


def bottleneck_forward(x_nhwc, kernel_params, out_channels, block_batch=1):
    """x_nhwc: (N, H, W, Cin) NHWC.  Returns (N, H, W, out_channels) bf16."""
    w1, b1, w2, b2, w3, b3 = kernel_params
    N, H, W, Cin = x_nhwc.shape
    CM = w1.shape[1]
    Cout = w3.shape[1]
    assert Cout == out_channels == Cin, \
        "downsample=None requires inplanes == planes*4"

    NB = block_batch
    assert N % NB == 0 and N // NB >= 1
    W_pad = _round_up(W + 2, 16)                 # bf16 sublane-tile aligned pitch
    M = NB * H * W

    x = x_nhwc.astype(jnp.bfloat16)              # bf16 activations at HBM boundary

    # Per-step VMEM estimate: double-buffered x/o blocks, resident weights,
    # bf16 halo scratch, bf16 im2col slab, f32 matmul temporaries. +50% headroom,
    # floor 32 MiB, cap 64 MiB (valid on v5e/v6e/v7x).
    est = (2 * (M * Cin + M * Cout) * 2
           + 2 * ((Cin * CM + 9 * CM * CM + CM * Cout) * 2 + (2 * CM + Cout) * 4)
           + NB * (H + 2) * W_pad * CM * 2
           + M * 9 * CM * 2
           + 3 * M * CM * 4 + M * Cout * 4)
    vmem_limit = int(min(max(est * 3 // 2, 32 * 2 ** 20), 64 * 2 ** 20))

    kernel = functools.partial(_bottleneck_kernel, NB=NB, H=H, W=W,
                               Cin=Cin, Cout=Cout, CM=CM)

    out = pl.pallas_call(
        kernel,
        out_shape=jax.ShapeDtypeStruct((N, H, W, Cout), jnp.bfloat16),
        grid_spec=pltpu.PrefetchScalarGridSpec(
            num_scalar_prefetch=0,
            grid=(N // NB,),
            in_specs=[
                pl.BlockSpec((NB, H, W, Cin), lambda b: (b, 0, 0, 0)),  # x (bf16)
                pl.BlockSpec((Cin, CM), lambda b: (0, 0)),        # w1 (bf16, BN folded)
                pl.BlockSpec((1, CM), lambda b: (0, 0)),          # b1 (f32)
                pl.BlockSpec((9 * CM, CM), lambda b: (0, 0)),     # w2 (im2col, bf16)
                pl.BlockSpec((1, CM), lambda b: (0, 0)),          # b2 (f32)
                pl.BlockSpec((CM, Cout), lambda b: (0, 0)),       # w3 (bf16)
                pl.BlockSpec((1, Cout), lambda b: (0, 0)),        # b3 (f32)
            ],
            out_specs=pl.BlockSpec((NB, H, W, Cout), lambda b: (b, 0, 0, 0)),
            scratch_shapes=[pltpu.VMEM((NB, H + 2, W_pad, CM), jnp.bfloat16)],
        ),
        compiler_params=pltpu.CompilerParams(
            dimension_semantics=("parallel",),
            vmem_limit_bytes=vmem_limit),
    )(x, w1, b1, w2, b2, w3, b3)

    return out


# ---------------------------------------------------------------------------
# Parameter construction (deterministic, synthetic), host-side preparation,
# and a plain-JAX f32 reference.
# ---------------------------------------------------------------------------
def _fold_bn(key, c, eps=1e-5):
    k1, k2, k3, k4 = jax.random.split(key, 4)
    gamma = jax.random.uniform(k1, (c,), jnp.float32, 0.5, 1.5)
    beta = 0.1 * jax.random.normal(k2, (c,), jnp.float32)
    mean = 0.1 * jax.random.normal(k3, (c,), jnp.float32)
    var = jax.random.uniform(k4, (c,), jnp.float32, 0.5, 1.5)
    scale = gamma / jnp.sqrt(var + eps)
    bias = beta - mean * scale
    return scale.reshape(1, c), bias.reshape(1, c)


def make_params(key, inplanes, planes, base_width=64, groups=1):
    """Raw f32 module parameters (BN folded to inference scale/bias)."""
    width = int(planes * (base_width / 64.0)) * groups
    cout = planes * 4
    ks = jax.random.split(key, 6)
    # weights stored ready for x @ W (transposed vs. PyTorch OIHW)
    w1 = 0.1 * jax.random.normal(ks[0], (inplanes, width), jnp.float32)
    w2 = 0.1 * jax.random.normal(ks[1], (9, width, width), jnp.float32)
    w3 = 0.1 * jax.random.normal(ks[2], (width, cout), jnp.float32)
    s1, b1 = _fold_bn(ks[3], width)
    s2, b2 = _fold_bn(ks[4], width)
    s3, b3 = _fold_bn(ks[5], cout)
    return (w1, s1, b1, w2, s2, b2, w3, s3, b3)


def prepare_params(params, lane=128):
    """One-time host prep: fold BN scales into the conv weights, lane-pad only
    the conv *width* (CM) channel dim, cast matmul weights to bf16 (biases stay
    f32 for the f32 epilogues).  Cin / Cout stay at their true sizes so HBM
    traffic for x / out is not inflated."""
    w1, s1, b1, w2, s2, b2, w3, s3, b3 = params
    cin, width = w1.shape
    cout = w3.shape[1]
    CM = _round_up(width, lane)
    dw = CM - width

    w1p = jnp.pad(w1 * s1, ((0, 0), (0, dw))).astype(jnp.bfloat16)      # (Cin, CM)
    w2p = jnp.pad(w2 * s2, ((0, 0), (0, dw), (0, dw)))
    w2p = w2p.reshape(9 * CM, CM).astype(jnp.bfloat16)                  # im2col rows
    w3p = jnp.pad(w3 * s3, ((0, dw), (0, 0))).astype(jnp.bfloat16)      # (CM, Cout)
    b1p = jnp.pad(b1, ((0, 0), (0, dw))).astype(jnp.float32)
    b2p = jnp.pad(b2, ((0, 0), (0, dw))).astype(jnp.float32)
    b3p = b3.astype(jnp.float32)
    return (w1p, b1p, w2p, b2p, w3p, b3p)


def bottleneck_reference(x_nhwc, params):
    """Pure-JAX f32 reference (same math as the module, NHWC)."""
    w1, s1, b1, w2, s2, b2, w3, s3, b3 = params
    x = x_nhwc.astype(jnp.float32)
    N, H, W, Cin = x.shape
    Cmid = w1.shape[1]
    h1 = jnp.maximum(jnp.einsum('nhwc,cd->nhwd', x, w1) * s1[0] + b1[0], 0.0)
    hp = jnp.pad(h1, ((0, 0), (1, 1), (1, 1), (0, 0)))
    acc = jnp.zeros((N, H, W, Cmid), jnp.float32)
    for ky in range(3):
        for kx in range(3):
            acc = acc + jnp.einsum('nhwc,cd->nhwd',
                                   hp[:, ky:ky + H, kx:kx + W, :],
                                   w2[ky * 3 + kx])
    h2 = jnp.maximum(acc * s2[0] + b2[0], 0.0)
    h3 = jnp.einsum('nhwc,cd->nhwd', h2, w3) * s3[0] + b3[0]
    return jnp.maximum(h3 + x, 0.0)


if __name__ == "__main__":
    # Bottleneck(inplanes=32, planes=8, dims=2, stride=1, downsample=None)
    N, inplanes, planes, H, W = 2, 32, 8, 8, 8

    key = jax.random.PRNGKey(0)
    kx, kp = jax.random.split(key)
    x = jax.random.normal(kx, (N, H, W, inplanes), jnp.float32)   # NHWC
    params = make_params(kp, inplanes, planes)
    kparams = prepare_params(params)

    out = jax.block_until_ready(
        bottleneck_forward(x, kparams, out_channels=planes * 4))
    ref = jax.block_until_ready(bottleneck_reference(x, params))

    assert out.shape == (N, H, W, planes * 4)
    out_f = out.astype(jnp.float32)
    max_err = float(jnp.max(jnp.abs(out_f - ref)))
    # Tolerance accounts for bf16 weights (BN-folded), bf16 activations at the
    # HBM boundary and a bf16 output store.
    assert jnp.allclose(out_f, ref, rtol=3e-2, atol=3e-2), max_err
    print("KERNEL_OK")
</pallas_src>

<mosaic_0001>
module attributes {stable_mosaic.version = 11 : i64} {
  func.func @_bottleneck_kernel(%arg0: i32, %arg1: memref<1x8x8x32xbf16, #tpu.memory_space<vmem>>, %arg2: memref<32x128xbf16, #tpu.memory_space<vmem>>, %arg3: memref<1x128xf32, #tpu.memory_space<vmem>>, %arg4: memref<1152x128xbf16, #tpu.memory_space<vmem>>, %arg5: memref<1x128xf32, #tpu.memory_space<vmem>>, %arg6: memref<128x32xbf16, #tpu.memory_space<vmem>>, %arg7: memref<1x32xf32, #tpu.memory_space<vmem>>, %arg8: memref<1x8x8x32xbf16, #tpu.memory_space<vmem>>, %arg9: memref<1x10x16x128xbf16, #tpu.memory_space<vmem>>) attributes {dimension_semantics = [#tpu.dimension_semantics<parallel>], iteration_bounds = array<i64: 2>, scalar_prefetch = 0 : i64, scratch_operands = 1 : i64, tpu.core_type = #tpu.core_type<tc>, window_params = [{transform_indices = @transform_0, window_bounds = array<i64: 1, 8, 8, 32>}, {pipeline_mode = #tpu.pipeline_mode<synchronous>, transform_indices = @transform_1, window_bounds = array<i64: 32, 128>}, {pipeline_mode = #tpu.pipeline_mode<synchronous>, transform_indices = @transform_2, window_bounds = array<i64: 1, 128>}, {pipeline_mode = #tpu.pipeline_mode<synchronous>, transform_indices = @transform_3, window_bounds = array<i64: 1152, 128>}, {pipeline_mode = #tpu.pipeline_mode<synchronous>, transform_indices = @transform_4, window_bounds = array<i64: 1, 128>}, {pipeline_mode = #tpu.pipeline_mode<synchronous>, transform_indices = @transform_5, window_bounds = array<i64: 128, 32>}, {pipeline_mode = #tpu.pipeline_mode<synchronous>, transform_indices = @transform_6, window_bounds = array<i64: 1, 32>}, {transform_indices = @transform_7, window_bounds = array<i64: 1, 8, 8, 32>}]} {
    %c0 = arith.constant 0 : index
    %c0_0 = arith.constant 0 : index
    %c0_1 = arith.constant 0 : index
    %c0_2 = arith.constant 0 : index
    %0 = vector.load %arg1[%c0, %c0_0, %c0_1, %c0_2] : memref<1x8x8x32xbf16, #tpu.memory_space<vmem>>, vector<1x8x8x32xbf16>
    %1 = vector.shape_cast %0 : vector<1x8x8x32xbf16> to vector<64x32xbf16>
    %c0_3 = arith.constant 0 : index
    %c0_4 = arith.constant 0 : index
    %2 = vector.load %arg2[%c0_3, %c0_4] : memref<32x128xbf16, #tpu.memory_space<vmem>>, vector<32x128xbf16>
    %cst = arith.constant dense<0.000000e+00> : vector<64x128xf32>
    %3 = tpu.matmul %1, %2, %cst {dimension_numbers = #tpu.dot_dimension_numbers<[1], [0], [0], [1], [0, 0, 1, 1], [], []>} : vector<64x32xbf16>, vector<32x128xbf16>, vector<64x128xf32> -> vector<64x128xf32>
    %c0_5 = arith.constant 0 : index
    %c0_6 = arith.constant 0 : index
    %4 = vector.load %arg3[%c0_5, %c0_6] : memref<1x128xf32, #tpu.memory_space<vmem>>, vector<1x128xf32>
    %5 = vector.broadcast %4 : vector<1x128xf32> to vector<64x128xf32>
    %6 = arith.addf %3, %5 : vector<64x128xf32>
    %cst_7 = arith.constant 0.000000e+00 : f32
    %7 = vector.broadcast %cst_7 : f32 to vector<64x128xf32>
    %8 = arith.maximumf %6, %7 : vector<64x128xf32>
    %9 = arith.truncf %8 : vector<64x128xf32> to vector<64x128xbf16>
    %cst_8 = arith.constant 0.000000e+00 : bf16
    %10 = vector.broadcast %cst_8 : bf16 to vector<1x8x1x128xbf16>
    %cst_9 = arith.constant 0.000000e+00 : bf16
    %11 = vector.broadcast %cst_9 : bf16 to vector<1x1x10x128xbf16>
    %12 = vector.shape_cast %9 : vector<64x128xbf16> to vector<1x8x8x128xbf16>
    %13 = tpu.concatenate %10, %12, %10 in 2 : vector<1x8x1x128xbf16>, vector<1x8x8x128xbf16>, vector<1x8x1x128xbf16> -> vector<1x8x10x128xbf16>
    %c0_10 = arith.constant 0 : index
    %c0_11 = arith.constant 0 : index
    %c0_12 = arith.constant 0 : index
    %c0_13 = arith.constant 0 : index
    %14 = vector.load %arg9[%c0_10, %c0_11, %c0_12, %c0_13] : memref<1x10x16x128xbf16, #tpu.memory_space<vmem>>, vector<1x1x10x128xbf16>
    tpu.vector_store %arg9[%c0_10, %c0_11, %c0_12, %c0_13], %11 {strides = array<i32>} : memref<1x10x16x128xbf16, #tpu.memory_space<vmem>>, vector<1x1x10x128xbf16>,
    %c0_14 = arith.constant 0 : index
    %c9 = arith.constant 9 : index
    %c0_15 = arith.constant 0 : index
    %c0_16 = arith.constant 0 : index
    %15 = vector.load %arg9[%c0_14, %c9, %c0_15, %c0_16] : memref<1x10x16x128xbf16, #tpu.memory_space<vmem>>, vector<1x1x10x128xbf16>
    tpu.vector_store %arg9[%c0_14, %c9, %c0_15, %c0_16], %11 {strides = array<i32>} : memref<1x10x16x128xbf16, #tpu.memory_space<vmem>>, vector<1x1x10x128xbf16>,
    %c0_17 = arith.constant 0 : index
    %c1 = arith.constant 1 : index
    %c0_18 = arith.constant 0 : index
    %c0_19 = arith.constant 0 : index
    %16 = vector.load %arg9[%c0_17, %c1, %c0_18, %c0_19] : memref<1x10x16x128xbf16, #tpu.memory_space<vmem>>, vector<1x8x10x128xbf16>
    tpu.vector_store %arg9[%c0_17, %c1, %c0_18, %c0_19], %13 {strides = array<i32>} : memref<1x10x16x128xbf16, #tpu.memory_space<vmem>>, vector<1x8x10x128xbf16>,
    %c0_20 = arith.constant 0 : index
    %c0_21 = arith.constant 0 : index
    %c0_22 = arith.constant 0 : index
    %c0_23 = arith.constant 0 : index
    %17 = vector.load %arg9[%c0_20, %c0_21, %c0_22, %c0_23] : memref<1x10x16x128xbf16, #tpu.memory_space<vmem>>, vector<1x8x8x128xbf16>
    %c0_24 = arith.constant 0 : index
    %c0_25 = arith.constant 0 : index
    %c1_26 = arith.constant 1 : index
    %c0_27 = arith.constant 0 : index
    %18 = vector.load %arg9[%c0_24, %c0_25, %c1_26, %c0_27] : memref<1x10x16x128xbf16, #tpu.memory_space<vmem>>, vector<1x8x8x128xbf16>
    %c0_28 = arith.constant 0 : index
    %c0_29 = arith.constant 0 : index
    %c2 = arith.constant 2 : index
    %c0_30 = arith.constant 0 : index
    %19 = vector.load %arg9[%c0_28, %c0_29, %c2, %c0_30] : memref<1x10x16x128xbf16, #tpu.memory_space<vmem>>, vector<1x8x8x128xbf16>
    %c0_31 = arith.constant 0 : index
    %c1_32 = arith.constant 1 : index
    %c0_33 = arith.constant 0 : index
    %c0_34 = arith.constant 0 : index
    %20 = vector.load %arg9[%c0_31, %c1_32, %c0_33, %c0_34] : memref<1x10x16x128xbf16, #tpu.memory_space<vmem>>, vector<1x8x8x128xbf16>
    %c0_35 = arith.constant 0 : index
    %c1_36 = arith.constant 1 : index
    %c1_37 = arith.constant 1 : index
    %c0_38 = arith.constant 0 : index
    %21 = vector.load %arg9[%c0_35, %c1_36, %c1_37, %c0_38] : memref<1x10x16x128xbf16, #tpu.memory_space<vmem>>, vector<1x8x8x128xbf16>
    %c0_39 = arith.constant 0 : index
    %c1_40 = arith.constant 1 : index
    %c2_41 = arith.constant 2 : index
    %c0_42 = arith.constant 0 : index
    %22 = vector.load %arg9[%c0_39, %c1_40, %c2_41, %c0_42] : memref<1x10x16x128xbf16, #tpu.memory_space<vmem>>, vector<1x8x8x128xbf16>
    %c0_43 = arith.constant 0 : index
    %c2_44 = arith.constant 2 : index
    %c0_45 = arith.constant 0 : index
    %c0_46 = arith.constant 0 : index
    %23 = vector.load %arg9[%c0_43, %c2_44, %c0_45, %c0_46] : memref<1x10x16x128xbf16, #tpu.memory_space<vmem>>, vector<1x8x8x128xbf16>
    %c0_47 = arith.constant 0 : index
    %c2_48 = arith.constant 2 : index
    %c1_49 = arith.constant 1 : index
    %c0_50 = arith.constant 0 : index
    %24 = vector.load %arg9[%c0_47, %c2_48, %c1_49, %c0_50] : memref<1x10x16x128xbf16, #tpu.memory_space<vmem>>, vector<1x8x8x128xbf16>
    %c0_51 = arith.constant 0 : index
    %c2_52 = arith.constant 2 : index
    %c2_53 = arith.constant 2 : index
    %c0_54 = arith.constant 0 : index
    %25 = vector.load %arg9[%c0_51, %c2_52, %c2_53, %c0_54] : memref<1x10x16x128xbf16, #tpu.memory_space<vmem>>, vector<1x8x8x128xbf16>
    %26 = tpu.concatenate %17, %18, %19, %20, %21, %22, %23, %24, %25 in 3 : vector<1x8x8x128xbf16>, vector<1x8x8x128xbf16>, vector<1x8x8x128xbf16>, vector<1x8x8x128xbf16>, vector<1x8x8x128xbf16>, vector<1x8x8x128xbf16>, vector<1x8x8x128xbf16>, vector<1x8x8x128xbf16>, vector<1x8x8x128xbf16> -> vector<1x8x8x1152xbf16>
    %27 = vector.shape_cast %26 : vector<1x8x8x1152xbf16> to vector<64x1152xbf16>
    %c0_55 = arith.constant 0 : index
    %c0_56 = arith.constant 0 : index
    %28 = vector.load %arg4[%c0_55, %c0_56] : memref<1152x128xbf16, #tpu.memory_space<vmem>>, vector<1152x128xbf16>
    %cst_57 = arith.constant dense<0.000000e+00> : vector<64x128xf32>
    %29 = tpu.matmul %27, %28, %cst_57 {dimension_numbers = #tpu.dot_dimension_numbers<[1], [0], [0], [1], [0, 0, 1, 1], [], []>} : vector<64x1152xbf16>, vector<1152x128xbf16>, vector<64x128xf32> -> vector<64x128xf32>
    %c0_58 = arith.constant 0 : index
    %c0_59 = arith.constant 0 : index
    %30 = vector.load %arg5[%c0_58, %c0_59] : memref<1x128xf32, #tpu.memory_space<vmem>>, vector<1x128xf32>
    %31 = vector.broadcast %30 : vector<1x128xf32> to vector<64x128xf32>
    %32 = arith.addf %29, %31 : vector<64x128xf32>
    %cst_60 = arith.constant 0.000000e+00 : f32
    %33 = vector.broadcast %cst_60 : f32 to vector<64x128xf32>
    %34 = arith.maximumf %32, %33 : vector<64x128xf32>
    %35 = arith.truncf %34 : vector<64x128xf32> to vector<64x128xbf16>
    %c0_61 = arith.constant 0 : index
    %c0_62 = arith.constant 0 : index
    %36 = vector.load %arg6[%c0_61, %c0_62] : memref<128x32xbf16, #tpu.memory_space<vmem>>, vector<128x32xbf16>
    %cst_63 = arith.constant dense<0.000000e+00> : vector<64x32xf32>
    %37 = tpu.matmul %35, %36, %cst_63 {dimension_numbers = #tpu.dot_dimension_numbers<[1], [0], [0], [1], [0, 0, 1, 1], [], []>} : vector<64x128xbf16>, vector<128x32xbf16>, vector<64x32xf32> -> vector<64x32xf32>
    %c0_64 = arith.constant 0 : index
    %c0_65 = arith.constant 0 : index
    %38 = vector.load %arg7[%c0_64, %c0_65] : memref<1x32xf32, #tpu.memory_space<vmem>>, vector<1x32xf32>
    %39 = vector.broadcast %38 : vector<1x32xf32> to vector<64x32xf32>
    %40 = arith.addf %37, %39 : vector<64x32xf32>
    %41 = arith.extf %1 : vector<64x32xbf16> to vector<64x32xf32>
    %42 = arith.addf %40, %41 : vector<64x32xf32>
    %cst_66 = arith.constant 0.000000e+00 : f32
    %43 = vector.broadcast %cst_66 : f32 to vector<64x32xf32>
    %44 = arith.maximumf %42, %43 : vector<64x32xf32>
    %45 = vector.shape_cast %44 : vector<64x32xf32> to vector<1x8x8x32xf32>
    %46 = arith.truncf %45 : vector<1x8x8x32xf32> to vector<1x8x8x32xbf16>
    %c0_67 = arith.constant 0 : index
    %c0_68 = arith.constant 0 : index
    %c0_69 = arith.constant 0 : index
    %c0_70 = arith.constant 0 : index
    %47 = vector.load %arg8[%c0_67, %c0_68, %c0_69, %c0_70] : memref<1x8x8x32xbf16, #tpu.memory_space<vmem>>, vector<1x8x8x32xbf16>
    tpu.vector_store %arg8[%c0_67, %c0_68, %c0_69, %c0_70], %46 {strides = array<i32>} : memref<1x8x8x32xbf16, #tpu.memory_space<vmem>>, vector<1x8x8x32xbf16>,
    return
  }
  func.func @transform_0(%arg0: i32) -> (i32, i32, i32, i32) {
    %c0_i32 = arith.constant 0 : i32
    %c0_i32_0 = arith.constant 0 : i32
    %c0_i32_1 = arith.constant 0 : i32
    %c0_i32_2 = arith.constant 0 : i32
    return %arg0, %c0_i32, %c0_i32_0, %c0_i32_1 : i32, i32, i32, i32
  }
  func.func @transform_1(%arg0: i32) -> (i32, i32) {
    %c0_i32 = arith.constant 0 : i32
    %c0_i32_0 = arith.constant 0 : i32
    %c0_i32_1 = arith.constant 0 : i32
    return %c0_i32, %c0_i32_0 : i32, i32
  }
  func.func @transform_2(%arg0: i32) -> (i32, i32) {
    %c0_i32 = arith.constant 0 : i32
    %c0_i32_0 = arith.constant 0 : i32
    %c0_i32_1 = arith.constant 0 : i32
    return %c0_i32, %c0_i32_0 : i32, i32
  }
  func.func @transform_3(%arg0: i32) -> (i32, i32) {
    %c0_i32 = arith.constant 0 : i32
    %c0_i32_0 = arith.constant 0 : i32
    %c0_i32_1 = arith.constant 0 : i32
    return %c0_i32, %c0_i32_0 : i32, i32
  }
  func.func @transform_4(%arg0: i32) -> (i32, i32) {
    %c0_i32 = arith.constant 0 : i32
    %c0_i32_0 = arith.constant 0 : i32
    %c0_i32_1 = arith.constant 0 : i32
    return %c0_i32, %c0_i32_0 : i32, i32
  }
  func.func @transform_5(%arg0: i32) -> (i32, i32) {
    %c0_i32 = arith.constant 0 : i32
    %c0_i32_0 = arith.constant 0 : i32
    %c0_i32_1 = arith.constant 0 : i32
    return %c0_i32, %c0_i32_0 : i32, i32
  }
  func.func @transform_6(%arg0: i32) -> (i32, i32) {
    %c0_i32 = arith.constant 0 : i32
    %c0_i32_0 = arith.constant 0 : i32
    %c0_i32_1 = arith.constant 0 : i32
    return %c0_i32, %c0_i32_0 : i32, i32
  }
  func.func @transform_7(%arg0: i32) -> (i32, i32, i32, i32) {
    %c0_i32 = arith.constant 0 : i32
    %c0_i32_0 = arith.constant 0 : i32
    %c0_i32_1 = arith.constant 0 : i32
    %c0_i32_2 = arith.constant 0 : i32
    return %arg0, %c0_i32, %c0_i32_0, %c0_i32_1 : i32, i32, i32, i32
  }
}

</mosaic_0001>

<llo_original>
// kernel: tpu_custom_call.1
$region0: #{tpu_custom_call.1}
  #allocation0 [shape = 'u32[]', space=smem, size = 0x4, offset = 0x4, fixed_abs, tag = 'smem constant byte address 0x4 - core index']
  #allocation1 [shape = 'u32[144,128]{1,0:T(1,128)}', space=vmem, size = 0x12000, scoped, tag = 'internal scratch']
  #allocation2 [shape = 'bf16[1,10,16,128]{3,2,1,0:T(8,128)(2,1)}', space=vmem, size = 0xa000, scoped, tag = 'scratch operand']
  %s0 = inlined_call_operand.vmem [shape: bf16[2,8,8,32], index: 0, kind: input, shape index: {}]
  %s1 = inlined_call_operand.vmem [shape: bf16[32,128], index: 1, kind: input, shape index: {}]
  %s2 = inlined_call_operand.vmem [shape: f32[1,128], index: 2, kind: input, shape index: {}]
  %s3 = inlined_call_operand.hbm [shape: bf16[1152,128], index: 3, kind: input, shape index: {}]
  %s4 = inlined_call_operand.vmem [shape: f32[1,128], index: 4, kind: input, shape index: {}]
  %s5 = inlined_call_operand.vmem [shape: bf16[128,32], index: 5, kind: input, shape index: {}]
  %s6 = inlined_call_operand.vmem [shape: f32[1,32], index: 6, kind: input, shape index: {}]
  %s7 = inlined_call_operand.hbm [shape: bf16[2,8,8,32], index: 7, kind: output, shape index: {}]
  %s8 = sld [smem:[#allocation0]]
  $region65: #{tpu_custom_call.1} parent=0
    _
  %s10 = ssub.s32 1, %s8
  %s11 = scalar_select 0, %s10, %s8
  $region1: #{tpu_custom_call.1} parent=0
    #allocation3 [shape = 'u8[294912]{0}', space=vmem, size = 0x48000, scoped, tag = 'input window, operand 3, single buffered']
    #allocation4 [shape = 's32[2]{0}', space=sflag, size = 0x8, scoped, tag = 'scoped memory for tpu_custom_call.1']
    #allocation5 [shape = 's32[2]{0}', space=sflag, size = 0x8, scoped, tag = 'scoped memory for tpu_custom_call.1']
    #allocation6 [shape = 'u8[32768]{0}', space=vmem, size = 0x8000, scoped, tag = 'output window, operand 0']
    %12 = vsyncpa [#allocation4], 0
    %13 = vsyncpa [#allocation5], 0
    %s14 = scalar_lea.sflag [#allocation5], 1
    %15 = vsyncpa %s14, 0
    loop: start=0, step=1, limit=4
    $region2: #{tpu_custom_call.1} parent=1 // loop_pre_header
      _
    $region3: #{tpu_custom_call.1} parent=1 // loop_header
      %s17 = sphi 0, %s21
      %p18 = scmp.ge.s32.totalorder %s17, 4
      %s27 = sphi 0, %s29
      %s30 = sphi 0, %s27
      %s31 = sphi 0, %s30
      %s47 = sphi 0, %s31
      %s51 = sphi 0, %s51
      %s53 = sphi 0, %s51
      %s54 = sphi 0, %s53
      %s68 = sphi 0, %s54
      %s72 = sphi 0, %s72
      %s74 = sphi 0, %s72
      %s75 = sphi 0, %s74
      %s89 = sphi 0, %s75
      %s93 = sphi 0, %s93
      %s95 = sphi 0, %s93
      %s96 = sphi 0, %s95
      %s110 = sphi 0, %s96
      %s114 = sphi 0, %s114
      %s116 = sphi 0, %s114
      %s117 = sphi 0, %s116
      %s131 = sphi 0, %s117
      %s135 = sphi 0, %s135
      %s137 = sphi 0, %s135
      %s138 = sphi 0, %s137
      %s152 = sphi 0, %s138
      %s156 = sphi 0, %s156
      %s158 = sphi 0, %s156
      %s159 = sphi 0, %s158
      %s173 = sphi 0, %s159
      %s179 = sphi 0, %s181
      %s182 = sphi 0, %s179
      %s183 = sphi 0, %s182
      %s199 = sphi 0, %s183
    $region4: #{tpu_custom_call.1} parent=1 // loop_header_branch
      %20 = sbr.rel (%p18) target = $region8
    $region5: #{tpu_custom_call.1} parent=1 // loop_body
      %s22 = ssub.s32 %s17, 1
      %s23 = ssub.s32 %s17, 2
      %s24 = sadd.s32 %s17, 1
      %s25 = ssub.s32 %s17, %s24
      %p26 = scmp.eq.s32.totalorder %s25, 0
      %s28 = sadd.s32 %s27, 1
      %s29 = scalar_select %p26, %s27, %s28
      %p32 = pneg %p26
      %p33 = scmp.eq.s32.totalorder %s17, 1
      %p34 = por %p32, %p33
      %p35 = scmp.ne.s32.totalorder %s27, %s30
      %p36 = scmp.eq.s32.totalorder %s17, 0
      %p37 = por %p35, %p36
      %p38 = scmp.ne.s32.totalorder %s27, %s30
      %p39 = scmp.eq.s32.totalorder %s22, 1
      %p40 = por %p38, %p39
      %p41 = scmp.ne.s32.totalorder %s30, %s31
      %p42 = scmp.eq.s32.totalorder %s22, 0
      %p43 = por %p41, %p42
      %p44 = scmp.ne.s32.totalorder %s30, %s31
      %p45 = scmp.eq.s32.totalorder %s23, 1
      %p46 = por %p44, %p45
      %p48 = scmp.ne.s32.totalorder %s31, %s47
      %p49 = scmp.eq.s32.totalorder %s23, 0
      %p50 = por %p48, %p49
      %s52 = sadd.s32 %s51, 1
      %p55 = scmp.eq.s32.totalorder %s17, 1
      %p56 = scmp.ne.s32.totalorder %s51, %s53
      %p57 = scmp.eq.s32.totalorder %s17, 0
      %p58 = por %p56, %p57
      %p59 = scmp.ne.s32.totalorder %s51, %s53
      %p60 = scmp.eq.s32.totalorder %s22, 1
      %p61 = por %p59, %p60
      %p62 = scmp.ne.s32.totalorder %s53, %s54
      %p63 = scmp.eq.s32.totalorder %s22, 0
      %p64 = por %p62, %p63
      %p65 = scmp.ne.s32.totalorder %s53, %s54
      %p66 = scmp.eq.s32.totalorder %s23, 1
      %p67 = por %p65, %p66
      %p69 = scmp.ne.s32.totalorder %s54, %s68
      %p70 = scmp.eq.s32.totalorder %s23, 0
      %p71 = por %p69, %p70
      %s73 = sadd.s32 %s72, 1
      %p76 = scmp.eq.s32.totalorder %s17, 1
      %p77 = scmp.ne.s32.totalorder %s72, %s74
      %p78 = scmp.eq.s32.totalorder %s17, 0
      %p79 = por %p77, %p78
      %p80 = scmp.ne.s32.totalorder %s72, %s74
      %p81 = scmp.eq.s32.totalorder %s22, 1
      %p82 = por %p80, %p81
      %p83 = scmp.ne.s32.totalorder %s74, %s75
      %p84 = scmp.eq.s32.totalorder %s22, 0
      %p85 = por %p83, %p84
      %p86 = scmp.ne.s32.totalorder %s74, %s75
      %p87 = scmp.eq.s32.totalorder %s23, 1
      %p88 = por %p86, %p87
      %p90 = scmp.ne.s32.totalorder %s75, %s89
      %p91 = scmp.eq.s32.totalorder %s23, 0
      %p92 = por %p90, %p91
      %s94 = sadd.s32 %s93, 1
      %p97 = scmp.eq.s32.totalorder %s17, 1
      %p98 = scmp.ne.s32.totalorder %s93, %s95
      %p99 = scmp.eq.s32.totalorder %s17, 0
      %p100 = por %p98, %p99
      %p101 = scmp.ne.s32.totalorder %s93, %s95
      %p102 = scmp.eq.s32.totalorder %s22, 1
      %p103 = por %p101, %p102
      %p104 = scmp.ne.s32.totalorder %s95, %s96
      %p105 = scmp.eq.s32.totalorder %s22, 0
      %p106 = por %p104, %p105
      %p107 = scmp.ne.s32.totalorder %s95, %s96
      %p108 = scmp.eq.s32.totalorder %s23, 1
      %p109 = por %p107, %p108
      %p111 = scmp.ne.s32.totalorder %s96, %s110
      %p112 = scmp.eq.s32.totalorder %s23, 0
      %p113 = por %p111, %p112
      %s115 = sadd.s32 %s114, 1
      %p118 = scmp.eq.s32.totalorder %s17, 1
      %p119 = scmp.ne.s32.totalorder %s114, %s116
      %p120 = scmp.eq.s32.totalorder %s17, 0
      %p121 = por %p119, %p120
      %p122 = scmp.ne.s32.totalorder %s114, %s116
      %p123 = scmp.eq.s32.totalorder %s22, 1
      %p124 = por %p122, %p123
      %p125 = scmp.ne.s32.totalorder %s116, %s117
      %p126 = scmp.eq.s32.totalorder %s22, 0
      %p127 = por %p125, %p126
      %p128 = scmp.ne.s32.totalorder %s116, %s117
      %p129 = scmp.eq.s32.totalorder %s23, 1
      %p130 = por %p128, %p129
      %p132 = scmp.ne.s32.totalorder %s117, %s131
      %p133 = scmp.eq.s32.totalorder %s23, 0
      %p134 = por %p132, %p133
      %s136 = sadd.s32 %s135, 1
      %p139 = scmp.eq.s32.totalorder %s17, 1
      %p140 = scmp.ne.s32.totalorder %s135, %s137
      %p141 = scmp.eq.s32.totalorder %s17, 0
      %p142 = por %p140, %p141
      %p143 = scmp.ne.s32.totalorder %s135, %s137
      %p144 = scmp.eq.s32.totalorder %s22, 1
      %p145 = por %p143, %p144
      %p146 = scmp.ne.s32.totalorder %s137, %s138
      %p147 = scmp.eq.s32.totalorder %s22, 0
      %p148 = por %p146, %p147
      %p149 = scmp.ne.s32.totalorder %s137, %s138
      %p150 = scmp.eq.s32.totalorder %s23, 1
      %p151 = por %p149, %p150
      %p153 = scmp.ne.s32.totalorder %s138, %s152
      %p154 = scmp.eq.s32.totalorder %s23, 0
      %p155 = por %p153, %p154
      %s157 = sadd.s32 %s156, 1
      %p160 = scmp.eq.s32.totalorder %s17, 1
      %p161 = scmp.ne.s32.totalorder %s156, %s158
      %p162 = scmp.eq.s32.totalorder %s17, 0
      %p163 = por %p161, %p162
      %p164 = scmp.ne.s32.totalorder %s156, %s158
      %p165 = scmp.eq.s32.totalorder %s22, 1
      %p166 = por %p164, %p165
      %p167 = scmp.ne.s32.totalorder %s158, %s159
      %p168 = scmp.eq.s32.totalorder %s22, 0
      %p169 = por %p167, %p168
      %p170 = scmp.ne.s32.totalorder %s158, %s159
      %p171 = scmp.eq.s32.totalorder %s23, 1
      %p172 = por %p170, %p171
      %p174 = scmp.ne.s32.totalorder %s159, %s173
      %p175 = scmp.eq.s32.totalorder %s23, 0
      %p176 = por %p174, %p175
      %s177 = ssub.s32 %s17, %s24
      %p178 = scmp.eq.s32.totalorder %s177, 0
      %s180 = sadd.s32 %s179, 1
      %s181 = scalar_select %p178, %s179, %s180
      %p184 = pneg %p178
      %p185 = scmp.eq.s32.totalorder %s17, 1
      %p186 = por %p184, %p185
      %p187 = scmp.ne.s32.totalorder %s179, %s182
      %p188 = scmp.eq.s32.totalorder %s17, 0
      %p189 = por %p187, %p188
      %p190 = scmp.ne.s32.totalorder %s179, %s182
      %p191 = scmp.eq.s32.totalorder %s22, 1
      %p192 = por %p190, %p191
      %p193 = scmp.ne.s32.totalorder %s182, %s183
      %p194 = scmp.eq.s32.totalorder %s22, 0
      %p195 = por %p193, %p194
      %p196 = scmp.ne.s32.totalorder %s182, %s183
      %p197 = scmp.eq.s32.totalorder %s23, 1
      %p198 = por %p196, %p197
      %p200 = scmp.ne.s32.totalorder %s183, %s199
      %p201 = scmp.eq.s32.totalorder %s23, 0
      %p202 = por %p200, %p201
      %p203 = scmp.le.s32.totalorder 1, %s17
      %p204 = scmp.lt.s32.totalorder %s17, 3
      %p205 = pnand %p203, %p204
      %p206 = pneg %p205
      // Predicated region
      $region9: #{tpu_custom_call.1} parent=5 // pred_check
        _
      $region10: #{tpu_custom_call.1} parent=5 // pred_check_branch
        %208 = sbr.rel (%p205) target = $region12
      $region11: #{tpu_custom_call.1} parent=5 // pred_region
        %s209 = ssub.s32 %s17, 1
        // Predicated region
        $region13: #{tpu_custom_call.1} parent=11 // pred_check
          %p210 = pneg %p64
        $region14: #{tpu_custom_call.1} parent=11 // pred_check_branch
          %212 = sbr.rel (%p210) target = $region16
        $region15: #{tpu_custom_call.1} parent=11 // pred_region
          _
        $region16: #{tpu_custom_call.1} parent=11 // pred_fallthru
          _
        // Predicated region
        $region17: #{tpu_custom_call.1} parent=11 // pred_check
          %p213 = pneg %p85
        $region18: #{tpu_custom_call.1} parent=11 // pred_check_branch
          %215 = sbr.rel (%p213) target = $region20
        $region19: #{tpu_custom_call.1} parent=11 // pred_region
          _
        $region20: #{tpu_custom_call.1} parent=11 // pred_fallthru
          _
        // Predicated region
        $region21: #{tpu_custom_call.1} parent=11 // pred_check
          %p216 = pneg %p106
        $region22: #{tpu_custom_call.1} parent=11 // pred_check_branch
          %218 = sbr.rel (%p216) target = $region24
        $region23: #{tpu_custom_call.1} parent=11 // pred_region
          %s220 = ssub.s32 9216, 9216
          %221 = vsyncadd [#allocation4], %s220
          %s222 = sshll.u32 [#allocation3], 4
          %s223 = int_to_ptr.vmem [resolvable:$true] %s222
          %228 = dma.hbm_to_vmem [thread:$0]  %s3, 9216, %s223, [#allocation4], 64, 64, 4
        $region24: #{tpu_custom_call.1} parent=11 // pred_fallthru
          _
        // Predicated region
        $region25: #{tpu_custom_call.1} parent=11 // pred_check
          %p229 = pneg %p127
        $region26: #{tpu_custom_call.1} parent=11 // pred_check_branch
          %231 = sbr.rel (%p229) target = $region28
        $region27: #{tpu_custom_call.1} parent=11 // pred_region
          _
        $region28: #{tpu_custom_call.1} parent=11 // pred_fallthru
          _
        // Predicated region
        $region29: #{tpu_custom_call.1} parent=11 // pred_check
          %p232 = pneg %p148
        $region30: #{tpu_custom_call.1} parent=11 // pred_check_branch
          %234 = sbr.rel (%p232) target = $region32
        $region31: #{tpu_custom_call.1} parent=11 // pred_region
          _
        $region32: #{tpu_custom_call.1} parent=11 // pred_fallthru
          _
        // Predicated region
        $region33: #{tpu_custom_call.1} parent=11 // pred_check
          %p235 = pneg %p169
        $region34: #{tpu_custom_call.1} parent=11 // pred_check_branch
          %237 = sbr.rel (%p235) target = $region36
        $region35: #{tpu_custom_call.1} parent=11 // pred_region
          _
        $region36: #{tpu_custom_call.1} parent=11 // pred_fallthru
          _
      $region12: #{tpu_custom_call.1} parent=5 // pred_fallthru
        _
      %p238 = scmp.lt.s32.totalorder %s17, 2
      // Predicated region
      $region37: #{tpu_custom_call.1} parent=5 // pred_check
        %p239 = pneg %p238
      $region38: #{tpu_custom_call.1} parent=5 // pred_check_branch
        %241 = sbr.rel (%p239) target = $region40
      $region39: #{tpu_custom_call.1} parent=5 // pred_region
        // Predicated region
        $region41: #{tpu_custom_call.1} parent=39 // pred_check
          %p242 = pneg %p37
        $region42: #{tpu_custom_call.1} parent=39 // pred_check_branch
          %244 = sbr.rel (%p242) target = $region44
        $region43: #{tpu_custom_call.1} parent=39 // pred_region
          %p245 = scmp.lt.s32.totalorder %s17, 1
          %s246 = scalar_select %p245, %s17, 1
          %s247 = smul.addr %s246, 8
          %s248 = smul.addr %s247, 4
          %s249 = scalar_lea.vmem %s0, %s248
        $region44: #{tpu_custom_call.1} parent=39 // pred_fallthru
          _
      $region40: #{tpu_custom_call.1} parent=5 // pred_fallthru
        _
      %p250 = scmp.le.s32.totalorder 1, %s17
      %p251 = scmp.lt.s32.totalorder %s17, 3
      %p252 = pnand %p250, %p251
      %p253 = pneg %p252
      // Predicated region
      $region45: #{tpu_custom_call.1} parent=5 // pred_check
        _
      $region46: #{tpu_custom_call.1} parent=5 // pred_check_branch
        %255 = sbr.rel (%p252) target = $region48
      $region47: #{tpu_custom_call.1} parent=5 // pred_region
        %s256 = ssub.s32 %s17, 1
        // Predicated region
        $region49: #{tpu_custom_call.1} parent=47 // pred_check
          %p257 = pneg %p106
        $region50: #{tpu_custom_call.1} parent=47 // pred_check_branch
          %259 = sbr.rel (%p257) target = $region52
        $region51: #{tpu_custom_call.1} parent=47 // pred_region
          %260 = dma.done [#allocation4], 9216
        $region52: #{tpu_custom_call.1} parent=47 // pred_fallthru
          _
        %p261 = scmp.lt.s32.totalorder %s22, 1
        %s262 = scalar_select %p261, %s22, 1
        %s263 = smul.addr %s262, 8
        %s264 = smul.addr %s263, 4
        %s265 = scalar_lea.vmem %s0, %s264
        %p266 = pneg %p43
        %p267 = pneg %p40
        %p268 = pneg %p64
        %p269 = pneg %p61
        %p270 = pneg %p85
        %p271 = pneg %p82
        %p272 = pneg %p106
        %p273 = pneg %p103
        %p274 = pneg %p127
        %p275 = pneg %p124
        %p276 = pneg %p148
        %p277 = pneg %p145
        %p278 = pneg %p169
        %p279 = pneg %p166
        %p280 = pneg %p195
        %p281 = pneg %p192
        %s282 = sand.u32 %s182, 1
        %s283 = scalar_lea.sflag [#allocation5], %s282
        %s284 = sand.u32 %s182, 1
        %s285 = smul.addr %s284, 32
        %s286 = scalar_lea.vmem [#allocation6], %s285
        %p287 = scmp.lt.s32.totalorder %s22, 1
        %s288 = scalar_select %p287, %s22, 1
        %s289 = smul.addr %s288, 8
        %s290 = smul.addr %s289, 4
        %s291 = scalar_lea.vmem %s0, %s290
        %v293 = vld [vmem:[%s291] sm:$0xf]
        %v294 = vld [vmem:[%s291 + $0x4] sm:$0xf]
        %v295 = vld [vmem:[%s291 + $0x8] sm:$0xf]
        %v296 = vld [vmem:[%s291 + $0xc] sm:$0xf]
        %v297 = vld [vmem:[%s291 + $0x10] sm:$0xf]
        %v298 = vld [vmem:[%s291 + $0x14] sm:$0xf]
        %v299 = vld [vmem:[%s291 + $0x18] sm:$0xf]
        %v300 = vld [vmem:[%s291 + $0x1c] sm:$0xf]
        %v301 = vld [vmem:[%s1] sm:$0xf]
        %v302 = vld [vmem:[%s1 + $0x4] sm:$0xf]
        %v303 = vld [vmem:[%s1 + $0x8] sm:$0xf]
        %v304 = vld [vmem:[%s1 + $0xc] sm:$0xf]
        %v305 = vld [vmem:[%s2] sm:$0x1]
        %v307 = vlaneseq
        %v308 = vshrl.u32 %v307, 7
        %v309 = vsub.s32 0, %v308
        %v310 = vrot.slane %v305, %v309
        %v320 = vunpack.c.l.b16 %v293
        %v321 = vunpack.c.l.b16 %v294
        %v322 = vunpack.c.l.b16 %v295
        %v323 = vunpack.c.l.b16 %v296
        %v324 = vunpack.c.l.b16 %v297
        %v325 = vunpack.c.l.b16 %v298
        %v326 = vunpack.c.l.b16 %v299
        %v327 = vunpack.c.l.b16 %v300
        %v328 = vpack.c.b16 %v321, %v320
        %v329 = vpack.c.b16 %v323, %v322
        %v330 = vpack.c.b16 %v325, %v324
        %v331 = vpack.c.b16 %v327, %v326
        %v336 = vunpack.c.l.b16 %v301
        %v337 = vunpack.c.l.b16 %v302
        %v338 = vunpack.c.l.b16 %v303
        %v339 = vunpack.c.l.b16 %v304
        %v340 = vpack.c.b16 %v337, %v336
        %v341 = vpack.c.b16 %v339, %v338
        %vm344 = vcmask 261120
        %v346 = vsel %vm344, %v328, 0
        %v349 = vsel %vm344, %v329, 0
        %v352 = vsel %vm344, %v330, 0
        %v355 = vsel %vm344, %v331, 0
        %357 = vmatprep.subr.bf16.mxu0 0
        %358 = vmatpush1.bf16.msra.mxu0 0
        %359 = vmatprep.subr.bf16.mxu0 0
        %360 = vmatpush1.bf16.msra.mxu0 0
        %361 = vmatprep.subr.bf16.mxu0 0
        %362 = vmatpush1.bf16.msra.mxu0 0
        %363 = vmatprep.subr.bf16.mxu0 0
        %364 = vmatpush1.bf16.msra.mxu0 0
        %365 = vmatprep.subr.bf16.mxu0 0
        %366 = vmatpush1.bf16.msra.mxu0 0
        %367 = vmatprep.subr.bf16.mxu0 0
        %368 = vmatpush1.bf16.msra.mxu0 0
        %369 = vmatprep.subr.bf16.mxu0 0
        %370 = vmatpush1.bf16.msra.mxu0 %v341
        %371 = vmatprep.subr.bf16.mxu0 0
        %372 = vmatpush1.bf16.msra.mxu0 %v340
        %373 = vmatprep.subr.bf16.mxu0 0
        %374 = vmatpush2.bf16.msra.mxu0 0
        %375 = vmatprep.subr.bf16.mxu0 0
        %376 = vmatpush2.bf16.msra.mxu0 0
        %377 = vmatprep.subr.bf16.mxu0 0
        %378 = vmatpush2.bf16.msra.mxu0 0
        %379 = vmatprep.subr.bf16.mxu0 0
        %380 = vmatpush2.bf16.msra.mxu0 0
        %381 = vmatprep.subr.bf16.mxu0 0
        %382 = vmatpush2.bf16.msra.mxu0 0
        %383 = vmatprep.subr.bf16.mxu0 0
        %384 = vmatpush2.bf16.msra.mxu0 0
        %385 = vmatprep.subr.bf16.mxu0 0
        %386 = vmatpush2.bf16.msra.mxu0 0
        %387 = vmatprep.subr.bf16.mxu0 0
        %388 = vmatpush2.bf16.msra.mxu0 0
        %389 = vmatprep.mubr.bf16.mxu0 0
        %390 = vmatmul.mubr.bf16.gmra.mxu0 %v346
        %v391 = vpop.f32.mrf.mxu0
        %v392 = vadd.f32 %v310, %v391
        %v393 = vpop.f32.mrf.mxu0
        %v394 = vpop.f32.mrf.mxu0
        %v395 = vadd.f32 %v310, %v394
        %v396 = vpop.f32.mrf.mxu0
        %397 = vmatprep.mubr.bf16.mxu0 0
        %398 = vmatmul.mubr.bf16.gmra.mxu0 %v349
        %v399 = vpop.f32.mrf.mxu0
        %v400 = vadd.f32 %v310, %v399
        %v401 = vpop.f32.mrf.mxu0
        %v402 = vpop.f32.mrf.mxu0
        %v403 = vadd.f32 %v310, %v402
        %v404 = vpop.f32.mrf.mxu0
        %405 = vmatprep.mubr.bf16.mxu0 0
        %406 = vmatmul.mubr.bf16.gmra.mxu0 %v352
        %v407 = vpop.f32.mrf.mxu0
        %v408 = vadd.f32 %v310, %v407
        %v409 = vpop.f32.mrf.mxu0
        %v410 = vpop.f32.mrf.mxu0
        %v411 = vadd.f32 %v310, %v410
        %v412 = vpop.f32.mrf.mxu0
        %413 = vmatprep.mubr.bf16.mxu0 0
        %414 = vmatmul.mubr.bf16.gmra.mxu0 %v355
        %v415 = vpop.f32.mrf.mxu0
        %v416 = vadd.f32 %v310, %v415
        %v417 = vpop.f32.mrf.mxu0
        %v418 = vpop.f32.mrf.mxu0
        %v419 = vadd.f32 %v310, %v418
        %v420 = vpop.f32.mrf.mxu0
        %421 = vdwg.mxu0
        %v422 = vmax.f32 %v392, 0.0
        %v423 = vmax.f32 %v395, 0.0
        %v424 = vmax.f32 %v400, 0.0
        %v425 = vmax.f32 %v403, 0.0
        %v426 = vmax.f32 %v408, 0.0
        %v427 = vmax.f32 %v411, 0.0
        %v428 = vmax.f32 %v416, 0.0
        %v429 = vmax.f32 %v419, 0.0
        %v430 = vpack.c.bf16 %v423, %v422
        %v431 = vpack.c.bf16 %v425, %v424
        %v432 = vpack.c.bf16 %v427, %v426
        %v433 = vpack.c.bf16 %v429, %v428
        %v438 = vunpack.c.l.b16 %v430
        %v439 = vunpack.c.h.b16 %v430
        %v440 = vunpack.c.l.b16 %v431
        %v441 = vunpack.c.h.b16 %v431
        %v442 = vunpack.c.l.b16 %v432
        %v443 = vunpack.c.h.b16 %v432
        %v444 = vunpack.c.l.b16 %v433
        %v445 = vunpack.c.h.b16 %v433
        %v446 = vpack.c.b16 %v438, %v438
        %v447 = vpack.c.b16 %v439, %v439
        %v448 = vpack.c.b16 %v440, %v440
        %v449 = vpack.c.b16 %v441, %v441
        %v450 = vpack.c.b16 %v442, %v442
        %v451 = vpack.c.b16 %v443, %v443
        %v452 = vpack.c.b16 %v444, %v444
        %v453 = vpack.c.b16 %v445, %v445
        %v455 = vshrl.u32 %v446, 16
        %v457 = vrot.slane %v455, 7
        %v458 = vshll.u32 %v446, 16
        %v460 = vor.u32 %v457, %v458
        %v462 = vshrl.u32 %v447, 16
        %v464 = vrot.slane %v462, 7
        %v465 = vshll.u32 %v447, 16
        %v467 = vor.u32 %v464, %v465
        %v469 = vshrl.u32 %v448, 16
        %v471 = vrot.slane %v469, 7
        %v472 = vshll.u32 %v448, 16
        %v474 = vor.u32 %v471, %v472
        %v476 = vshrl.u32 %v449, 16
        %v478 = vrot.slane %v476, 7
        %v479 = vshll.u32 %v449, 16
        %v481 = vor.u32 %v478, %v479
        %v483 = vshrl.u32 %v450, 16
        %v485 = vrot.slane %v483, 7
        %v486 = vshll.u32 %v450, 16
        %v488 = vor.u32 %v485, %v486
        %v490 = vshrl.u32 %v451, 16
        %v492 = vrot.slane %v490, 7
        %v493 = vshll.u32 %v451, 16
        %v495 = vor.u32 %v492, %v493
        %v497 = vshrl.u32 %v452, 16
        %v499 = vrot.slane %v497, 7
        %v500 = vshll.u32 %v452, 16
        %v502 = vor.u32 %v499, %v500
        %v504 = vshrl.u32 %v453, 16
        %v506 = vrot.slane %v504, 7
        %v507 = vshll.u32 %v453, 16
        %v509 = vor.u32 %v506, %v507
        %vm518 = vcmask 1040384
        %vm519 = vsmask.f32 256
        %vm520 = vmand %vm518, %vm519
        %v521 = vsel %vm520, 0, %v460
        %v522 = vsel %vm520, 0, %v467
        %v523 = vsel %vm520, 0, %v474
        %v524 = vsel %vm520, 0, %v481
        %v525 = vsel %vm520, 0, %v488
        %v526 = vsel %vm520, 0, %v495
        %v527 = vsel %vm520, 0, %v502
        %v528 = vsel %vm520, 0, %v509
        %vm529 = vcmask 1044480
        %vm530 = vsmask.f32 4352
        %vm531 = vmand %vm529, %vm530
        %v532 = vsel %vm531, %v521, 0
        %v533 = vsel %vm531, %v522, 0
        %v534 = vsel %vm531, %v523, 0
        %v535 = vsel %vm531, %v524, 0
        %v536 = vsel %vm531, %v525, 0
        %v537 = vsel %vm531, %v526, 0
        %v538 = vsel %vm531, %v527, 0
        %v539 = vsel %vm531, %v528, 0
        %540 = vst [vmem:[#allocation2] sm:$0xf] 0
        %541 = vst [vmem:[#allocation2 + $0x4] sm:$0x1] 0
        %s542 = scalar_lea.vmem [#allocation2], 72
        %543 = vst [vmem:[%s542] sm:$0xf] 0
        %544 = vst [vmem:[%s542 + $0x4] sm:$0x1] 0
        %v553 = vunpack.c.l.b16 %v532
        %v554 = vunpack.c.h.b16 %v532
        %v555 = vunpack.c.l.b16 %v533
        %v556 = vunpack.c.h.b16 %v533
        %v557 = vunpack.c.l.b16 %v534
        %v558 = vunpack.c.h.b16 %v534
        %v559 = vunpack.c.l.b16 %v535
        %v560 = vunpack.c.h.b16 %v535
        %v561 = vunpack.c.l.b16 %v536
        %v562 = vunpack.c.h.b16 %v536
        %v563 = vunpack.c.l.b16 %v537
        %v564 = vunpack.c.h.b16 %v537
        %v565 = vunpack.c.l.b16 %v538
        %v566 = vunpack.c.h.b16 %v538
        %v567 = vunpack.c.l.b16 %v539
        %v568 = vunpack.c.h.b16 %v539
        %v569 = vpack.c.b16 %v553, %v553
        %v570 = vpack.c.b16 %v554, %v554
        %v571 = vpack.c.b16 %v555, %v555
        %v572 = vpack.c.b16 %v556, %v556
        %v573 = vpack.c.b16 %v557, %v557
        %v574 = vpack.c.b16 %v558, %v558
        %v575 = vpack.c.b16 %v559, %v559
        %v576 = vpack.c.b16 %v560, %v560
        %v577 = vpack.c.b16 %v561, %v561
        %v578 = vpack.c.b16 %v562, %v562
        %v579 = vpack.c.b16 %v563, %v563
        %v580 = vpack.c.b16 %v564, %v564
        %v581 = vpack.c.b16 %v565, %v565
        %v582 = vpack.c.b16 %v566, %v566
        %v583 = vpack.c.b16 %v567, %v567
        %v584 = vpack.c.b16 %v568, %v568
        %s601 = scalar_lea.vmem [#allocation2], 8
        %602 = vst [vmem:[%s601] sm:$0xf] %v569
        %603 = vst [vmem:[%s601 + $0x4] sm:$0x1] %v570
        %604 = vst [vmem:[%s601 + $0x8] sm:$0xf] %v571
        %605 = vst [vmem:[%s601 + $0xc] sm:$0x1] %v572
        %606 = vst [vmem:[%s601 + $0x10] sm:$0xf] %v573
        %607 = vst [vmem:[%s601 + $0x14] sm:$0x1] %v574
        %608 = vst [vmem:[%s601 + $0x18] sm:$0xf] %v575
        %609 = vst [vmem:[%s601 + $0x1c] sm:$0x1] %v576
        %610 = vst [vmem:[%s601 + $0x20] sm:$0xf] %v577
        %611 = vst [vmem:[%s601 + $0x24] sm:$0x1] %v578
        %612 = vst [vmem:[%s601 + $0x28] sm:$0xf] %v579
        %613 = vst [vmem:[%s601 + $0x2c] sm:$0x1] %v580
        %614 = vst [vmem:[%s601 + $0x30] sm:$0xf] %v581
        %615 = vst [vmem:[%s601 + $0x34] sm:$0x1] %v582
        %616 = vst [vmem:[%s601 + $0x38] sm:$0xf] %v583
        %617 = vst [vmem:[%s601 + $0x3c] sm:$0x1] %v584
        %v618 = vld [vmem:[#allocation2] sm:$0xf]
        %v619 = vld [vmem:[#allocation2 + $0x8] sm:$0xf]
        %v620 = vld [vmem:[#allocation2 + $0x10] sm:$0xf]
        %v621 = vld [vmem:[#allocation2 + $0x18] sm:$0xf]
        %v622 = vld [vmem:[#allocation2 + $0x20] sm:$0xf]
        %v623 = vld [vmem:[#allocation2 + $0x28] sm:$0xf]
        %v624 = vld [vmem:[#allocation2 + $0x30] sm:$0xf]
        %v625 = vld [vmem:[#allocation2 + $0x38] sm:$0xf]
        %v626 = vld [vmem:[#allocation2 + $0x4] sm:$0x1]
        %v627 = vld [vmem:[#allocation2 + $0xc] sm:$0x1]
        %v628 = vld [vmem:[#allocation2 + $0x14] sm:$0x1]
        %v629 = vld [vmem:[#allocation2 + $0x1c] sm:$0x1]
        %v630 = vld [vmem:[#allocation2 + $0x24] sm:$0x1]
        %v631 = vld [vmem:[#allocation2 + $0x2c] sm:$0x1]
        %v632 = vld [vmem:[#allocation2 + $0x34] sm:$0x1]
        %v633 = vld [vmem:[#allocation2 + $0x3c] sm:$0x1]
        %v634 = vld [vmem:[#allocation2] sm:$0xe]
        %v635 = vld [vmem:[#allocation2 + $0x8] sm:$0xe]
        %v636 = vld [vmem:[#allocation2 + $0x10] sm:$0xe]
        %v637 = vld [vmem:[#allocation2 + $0x18] sm:$0xe]
        %v638 = vld [vmem:[#allocation2 + $0x20] sm:$0xe]
        %v639 = vld [vmem:[#allocation2 + $0x28] sm:$0xe]
        %v640 = vld [vmem:[#allocation2 + $0x30] sm:$0xe]
        %v641 = vld [vmem:[#allocation2 + $0x38] sm:$0xe]
        %v642 = vld [vmem:[%s601] sm:$0xf]
        %v643 = vld [vmem:[%s601 + $0x8] sm:$0xf]
        %v644 = vld [vmem:[%s601 + $0x10] sm:$0xf]
        %v645 = vld [vmem:[%s601 + $0x18] sm:$0xf]
        %v646 = vld [vmem:[%s601 + $0x20] sm:$0xf]
        %v647 = vld [vmem:[%s601 + $0x28] sm:$0xf]
        %v648 = vld [vmem:[%s601 + $0x30] sm:$0xf]
        %v649 = vld [vmem:[%s601 + $0x38] sm:$0xf]
        %v650 = vld [vmem:[%s601 + $0x4] sm:$0x1]
        %v651 = vld [vmem:[%s601 + $0xc] sm:$0x1]
        %v652 = vld [vmem:[%s601 + $0x14] sm:$0x1]
        %v653 = vld [vmem:[%s601 + $0x1c] sm:$0x1]
        %v654 = vld [vmem:[%s601 + $0x24] sm:$0x1]
        %v655 = vld [vmem:[%s601 + $0x2c] sm:$0x1]
        %v656 = vld [vmem:[%s601 + $0x34] sm:$0x1]
        %v657 = vld [vmem:[%s601 + $0x3c] sm:$0x1]
        %v658 = vld [vmem:[%s601] sm:$0xe]
        %v659 = vld [vmem:[%s601 + $0x8] sm:$0xe]
        %v660 = vld [vmem:[%s601 + $0x10] sm:$0xe]
        %v661 = vld [vmem:[%s601 + $0x18] sm:$0xe]
        %v662 = vld [vmem:[%s601 + $0x20] sm:$0xe]
        %v663 = vld [vmem:[%s601 + $0x28] sm:$0xe]
        %v664 = vld [vmem:[%s601 + $0x30] sm:$0xe]
        %v665 = vld [vmem:[%s601 + $0x38] sm:$0xe]
        %s666 = scalar_lea.vmem [#allocation2], 16
        %v667 = vld [vmem:[%s666] sm:$0xf]
        %v668 = vld [vmem:[%s666 + $0x8] sm:$0xf]
        %v669 = vld [vmem:[%s666 + $0x10] sm:$0xf]
        %v670 = vld [vmem:[%s666 + $0x18] sm:$0xf]
        %v671 = vld [vmem:[%s666 + $0x20] sm:$0xf]
        %v672 = vld [vmem:[%s666 + $0x28] sm:$0xf]
        %v673 = vld [vmem:[%s666 + $0x30] sm:$0xf]
        %v674 = vld [vmem:[%s666 + $0x38] sm:$0xf]
        %v675 = vld [vmem:[%s666 + $0x4] sm:$0x1]
        %v676 = vld [vmem:[%s666 + $0xc] sm:$0x1]
        %v677 = vld [vmem:[%s666 + $0x14] sm:$0x1]
        %v678 = vld [vmem:[%s666 + $0x1c] sm:$0x1]
        %v679 = vld [vmem:[%s666 + $0x24] sm:$0x1]
        %v680 = vld [vmem:[%s666 + $0x2c] sm:$0x1]
        %v681 = vld [vmem:[%s666 + $0x34] sm:$0x1]
        %v682 = vld [vmem:[%s666 + $0x3c] sm:$0x1]
        %v683 = vld [vmem:[%s666] sm:$0xe]
        %v684 = vld [vmem:[%s666 + $0x8] sm:$0xe]
        %v685 = vld [vmem:[%s666 + $0x10] sm:$0xe]
        %v686 = vld [vmem:[%s666 + $0x18] sm:$0xe]
        %v687 = vld [vmem:[%s666 + $0x20] sm:$0xe]
        %v688 = vld [vmem:[%s666 + $0x28] sm:$0xe]
        %v689 = vld [vmem:[%s666 + $0x30] sm:$0xe]
        %v690 = vld [vmem:[%s666 + $0x38] sm:$0xe]
        %v707 = vunpack.c.l.b16 %v618
        %v708 = vunpack.c.l.b16 %v626
        %v709 = vunpack.c.l.b16 %v619
        %v710 = vunpack.c.l.b16 %v627
        %v711 = vunpack.c.l.b16 %v620
        %v712 = vunpack.c.l.b16 %v628
        %v713 = vunpack.c.l.b16 %v621
        %v714 = vunpack.c.l.b16 %v629
        %v715 = vunpack.c.l.b16 %v622
        %v716 = vunpack.c.l.b16 %v630
        %v717 = vunpack.c.l.b16 %v623
        %v718 = vunpack.c.l.b16 %v631
        %v719 = vunpack.c.l.b16 %v624
        %v720 = vunpack.c.l.b16 %v632
        %v721 = vunpack.c.l.b16 %v625
        %v722 = vunpack.c.l.b16 %v633
        %v723 = vpack.c.b16 %v708, %v707
        %v724 = vpack.c.b16 %v710, %v709
        %v725 = vpack.c.b16 %v712, %v711
        %v726 = vpack.c.b16 %v714, %v713
        %v727 = vpack.c.b16 %v716, %v715
        %v728 = vpack.c.b16 %v718, %v717
        %v729 = vpack.c.b16 %v720, %v719
        %v730 = vpack.c.b16 %v722, %v721
        %v732 = vshrl.u32 %v723, 16
        %v734 = vshll.u32 %v723, 16
        %v736 = vrot.slane %v734, 1
        %v737 = vor.u32 %v732, %v736
        %v739 = vshrl.u32 %v724, 16
        %v741 = vshll.u32 %v724, 16
        %v743 = vrot.slane %v741, 1
        %v744 = vor.u32 %v739, %v743
        %v746 = vshrl.u32 %v725, 16
        %v748 = vshll.u32 %v725, 16
        %v750 = vrot.slane %v748, 1
        %v751 = vor.u32 %v746, %v750
        %v753 = vshrl.u32 %v726, 16
        %v755 = vshll.u32 %v726, 16
        %v757 = vrot.slane %v755, 1
        %v758 = vor.u32 %v753, %v757
        %v760 = vshrl.u32 %v727, 16
        %v762 = vshll.u32 %v727, 16
        %v764 = vrot.slane %v762, 1
        %v765 = vor.u32 %v760, %v764
        %v767 = vshrl.u32 %v728, 16
        %v769 = vshll.u32 %v728, 16
        %v771 = vrot.slane %v769, 1
        %v772 = vor.u32 %v767, %v771
        %v774 = vshrl.u32 %v729, 16
        %v776 = vshll.u32 %v729, 16
        %v778 = vrot.slane %v776, 1
        %v779 = vor.u32 %v774, %v778
        %v781 = vshrl.u32 %v730, 16
        %v783 = vshll.u32 %v730, 16
        %v785 = vrot.slane %v783, 1
        %v786 = vor.u32 %v781, %v785
        %v795 = vunpack.c.l.b16 %v634
        %v796 = vunpack.c.l.b16 %v635
        %v797 = vunpack.c.l.b16 %v636
        %v798 = vunpack.c.l.b16 %v637
        %v799 = vunpack.c.l.b16 %v638
        %v800 = vunpack.c.l.b16 %v639
        %v801 = vunpack.c.l.b16 %v640
        %v802 = vunpack.c.l.b16 %v641
        %v803 = vpack.c.b16 %v708, %v795
        %v804 = vpack.c.b16 %v710, %v796
        %v805 = vpack.c.b16 %v712, %v797
        %v806 = vpack.c.b16 %v714, %v798
        %v807 = vpack.c.b16 %v716, %v799
        %v808 = vpack.c.b16 %v718, %v800
        %v809 = vpack.c.b16 %v720, %v801
        %v810 = vpack.c.b16 %v722, %v802
        %v811 = vrot.slane %v803, 1
        %v812 = vrot.slane %v804, 1
        %v813 = vrot.slane %v805, 1
        %v814 = vrot.slane %v806, 1
        %v815 = vrot.slane %v807, 1
        %v816 = vrot.slane %v808, 1
        %v817 = vrot.slane %v809, 1
        %v818 = vrot.slane %v810, 1
        %v835 = vunpack.c.l.b16 %v642
        %v836 = vunpack.c.l.b16 %v650
        %v837 = vunpack.c.l.b16 %v643
        %v838 = vunpack.c.l.b16 %v651
        %v839 = vunpack.c.l.b16 %v644
        %v840 = vunpack.c.l.b16 %v652
        %v841 = vunpack.c.l.b16 %v645
        %v842 = vunpack.c.l.b16 %v653
        %v843 = vunpack.c.l.b16 %v646
        %v844 = vunpack.c.l.b16 %v654
        %v845 = vunpack.c.l.b16 %v647
        %v846 = vunpack.c.l.b16 %v655
        %v847 = vunpack.c.l.b16 %v648
        %v848 = vunpack.c.l.b16 %v656
        %v849 = vunpack.c.l.b16 %v649
        %v850 = vunpack.c.l.b16 %v657
        %v851 = vpack.c.b16 %v836, %v835
        %v852 = vpack.c.b16 %v838, %v837
        %v853 = vpack.c.b16 %v840, %v839
        %v854 = vpack.c.b16 %v842, %v841
        %v855 = vpack.c.b16 %v844, %v843
        %v856 = vpack.c.b16 %v846, %v845
        %v857 = vpack.c.b16 %v848, %v847
        %v858 = vpack.c.b16 %v850, %v849
        %v860 = vshrl.u32 %v851, 16
        %v862 = vshll.u32 %v851, 16
        %v864 = vrot.slane %v862, 1
        %v865 = vor.u32 %v860, %v864
        %v867 = vshrl.u32 %v852, 16
        %v869 = vshll.u32 %v852, 16
        %v871 = vrot.slane %v869, 1
        %v872 = vor.u32 %v867, %v871
        %v874 = vshrl.u32 %v853, 16
        %v876 = vshll.u32 %v853, 16
        %v878 = vrot.slane %v876, 1
        %v879 = vor.u32 %v874, %v878
        %v881 = vshrl.u32 %v854, 16
        %v883 = vshll.u32 %v854, 16
        %v885 = vrot.slane %v883, 1
        %v886 = vor.u32 %v881, %v885
        %v888 = vshrl.u32 %v855, 16
        %v890 = vshll.u32 %v855, 16
        %v892 = vrot.slane %v890, 1
        %v893 = vor.u32 %v888, %v892
        %v895 = vshrl.u32 %v856, 16
        %v897 = vshll.u32 %v856, 16
        %v899 = vrot.slane %v897, 1
        %v900 = vor.u32 %v895, %v899
        %v902 = vshrl.u32 %v857, 16
        %v904 = vshll.u32 %v857, 16
        %v906 = vrot.slane %v904, 1
        %v907 = vor.u32 %v902, %v906
        %v909 = vshrl.u32 %v858, 16
        %v911 = vshll.u32 %v858, 16
        %v913 = vrot.slane %v911, 1
        %v914 = vor.u32 %v909, %v913
        %v923 = vunpack.c.l.b16 %v658
        %v924 = vunpack.c.l.b16 %v659
        %v925 = vunpack.c.l.b16 %v660
        %v926 = vunpack.c.l.b16 %v661
        %v927 = vunpack.c.l.b16 %v662
        %v928 = vunpack.c.l.b16 %v663
        %v929 = vunpack.c.l.b16 %v664
        %v930 = vunpack.c.l.b16 %v665
        %v931 = vpack.c.b16 %v836, %v923
        %v932 = vpack.c.b16 %v838, %v924
        %v933 = vpack.c.b16 %v840, %v925
        %v934 = vpack.c.b16 %v842, %v926
        %v935 = vpack.c.b16 %v844, %v927
        %v936 = vpack.c.b16 %v846, %v928
        %v937 = vpack.c.b16 %v848, %v929
        %v938 = vpack.c.b16 %v850, %v930
        %v939 = vrot.slane %v931, 1
        %v940 = vrot.slane %v932, 1
        %v941 = vrot.slane %v933, 1
        %v942 = vrot.slane %v934, 1
        %v943 = vrot.slane %v935, 1
        %v944 = vrot.slane %v936, 1
        %v945 = vrot.slane %v937, 1
        %v946 = vrot.slane %v938, 1
        %v963 = vunpack.c.l.b16 %v667
        %v964 = vunpack.c.l.b16 %v675
        %v965 = vunpack.c.l.b16 %v668
        %v966 = vunpack.c.l.b16 %v676
        %v967 = vunpack.c.l.b16 %v669
        %v968 = vunpack.c.l.b16 %v677
        %v969 = vunpack.c.l.b16 %v670
        %v970 = vunpack.c.l.b16 %v678
        %v971 = vunpack.c.l.b16 %v671
        %v972 = vunpack.c.l.b16 %v679
        %v973 = vunpack.c.l.b16 %v672
        %v974 = vunpack.c.l.b16 %v680
        %v975 = vunpack.c.l.b16 %v673
        %v976 = vunpack.c.l.b16 %v681
        %v977 = vunpack.c.l.b16 %v674
        %v978 = vunpack.c.l.b16 %v682
        %v979 = vpack.c.b16 %v964, %v963
        %v980 = vpack.c.b16 %v966, %v965
        %v981 = vpack.c.b16 %v968, %v967
        %v982 = vpack.c.b16 %v970, %v969
        %v983 = vpack.c.b16 %v972, %v971
        %v984 = vpack.c.b16 %v974, %v973
        %v985 = vpack.c.b16 %v976, %v975
        %v986 = vpack.c.b16 %v978, %v977
        %v988 = vshrl.u32 %v979, 16
        %v990 = vshll.u32 %v979, 16
        %v992 = vrot.slane %v990, 1
        %v993 = vor.u32 %v988, %v992
        %v995 = vshrl.u32 %v980, 16
        %v997 = vshll.u32 %v980, 16
        %v999 = vrot.slane %v997, 1
        %v1000 = vor.u32 %v995, %v999
        %v1002 = vshrl.u32 %v981, 16
        %v1004 = vshll.u32 %v981, 16
        %v1006 = vrot.slane %v1004, 1
        %v1007 = vor.u32 %v1002, %v1006
        %v1009 = vshrl.u32 %v982, 16
        %v1011 = vshll.u32 %v982, 16
        %v1013 = vrot.slane %v1011, 1
        %v1014 = vor.u32 %v1009, %v1013
        %v1016 = vshrl.u32 %v983, 16
        %v1018 = vshll.u32 %v983, 16
        %v1020 = vrot.slane %v1018, 1
        %v1021 = vor.u32 %v1016, %v1020
        %v1023 = vshrl.u32 %v984, 16
        %v1025 = vshll.u32 %v984, 16
        %v1027 = vrot.slane %v1025, 1
        %v1028 = vor.u32 %v1023, %v1027
        %v1030 = vshrl.u32 %v985, 16
        %v1032 = vshll.u32 %v985, 16
        %v1034 = vrot.slane %v1032, 1
        %v1035 = vor.u32 %v1030, %v1034
        %v1037 = vshrl.u32 %v986, 16
        %v1039 = vshll.u32 %v986, 16
        %v1041 = vrot.slane %v1039, 1
        %v1042 = vor.u32 %v1037, %v1041
        %v1051 = vunpack.c.l.b16 %v683
        %v1052 = vunpack.c.l.b16 %v684
        %v1053 = vunpack.c.l.b16 %v685
        %v1054 = vunpack.c.l.b16 %v686
        %v1055 = vunpack.c.l.b16 %v687
        %v1056 = vunpack.c.l.b16 %v688
        %v1057 = vunpack.c.l.b16 %v689
        %v1058 = vunpack.c.l.b16 %v690
        %v1059 = vpack.c.b16 %v964, %v1051
        %v1060 = vpack.c.b16 %v966, %v1052
        %v1061 = vpack.c.b16 %v968, %v1053
        %v1062 = vpack.c.b16 %v970, %v1054
        %v1063 = vpack.c.b16 %v972, %v1055
        %v1064 = vpack.c.b16 %v974, %v1056
        %v1065 = vpack.c.b16 %v976, %v1057
        %v1066 = vpack.c.b16 %v978, %v1058
        %v1067 = vrot.slane %v1059, 1
        %v1068 = vrot.slane %v1060, 1
        %v1069 = vrot.slane %v1061, 1
        %v1070 = vrot.slane %v1062, 1
        %v1071 = vrot.slane %v1063, 1
        %v1072 = vrot.slane %v1064, 1
        %v1073 = vrot.slane %v1065, 1
        %v1074 = vrot.slane %v1066, 1
        %v1075 = vunpack.c.l.b16 %v737
        %v1076 = vunpack.c.l.b16 %v811
        %v1077 = vunpack.c.l.b16 %v865
        %v1078 = vunpack.c.l.b16 %v939
        %v1079 = vunpack.c.l.b16 %v993
        %v1080 = vunpack.c.l.b16 %v1067
        %v1081 = vunpack.c.l.b16 %v744
        %v1082 = vunpack.c.l.b16 %v812
        %v1083 = vunpack.c.l.b16 %v872
        %v1084 = vunpack.c.l.b16 %v940
        %v1085 = vunpack.c.l.b16 %v1000
        %v1086 = vunpack.c.l.b16 %v1068
        %v1087 = vunpack.c.l.b16 %v751
        %v1088 = vunpack.c.l.b16 %v813
        %v1089 = vunpack.c.l.b16 %v879
        %v1090 = vunpack.c.l.b16 %v941
        %v1091 = vunpack.c.l.b16 %v1007
        %v1092 = vunpack.c.l.b16 %v1069
        %v1093 = vunpack.c.l.b16 %v758
        %v1094 = vunpack.c.l.b16 %v814
        %v1095 = vunpack.c.l.b16 %v886
        %v1096 = vunpack.c.l.b16 %v942
        %v1097 = vunpack.c.l.b16 %v1014
        %v1098 = vunpack.c.l.b16 %v1070
        %v1099 = vunpack.c.l.b16 %v765
        %v1100 = vunpack.c.l.b16 %v815
        %v1101 = vunpack.c.l.b16 %v893
        %v1102 = vunpack.c.l.b16 %v943
        %v1103 = vunpack.c.l.b16 %v1021
        %v1104 = vunpack.c.l.b16 %v1071
        %v1105 = vunpack.c.l.b16 %v772
        %v1106 = vunpack.c.l.b16 %v816
        %v1107 = vunpack.c.l.b16 %v900
        %v1108 = vunpack.c.l.b16 %v944
        %v1109 = vunpack.c.l.b16 %v1028
        %v1110 = vunpack.c.l.b16 %v1072
        %v1111 = vunpack.c.l.b16 %v779
        %v1112 = vunpack.c.l.b16 %v817
        %v1113 = vunpack.c.l.b16 %v907
        %v1114 = vunpack.c.l.b16 %v945
        %v1115 = vunpack.c.l.b16 %v1035
        %v1116 = vunpack.c.l.b16 %v1073
        %v1117 = vunpack.c.l.b16 %v786
        %v1118 = vunpack.c.l.b16 %v818
        %v1119 = vunpack.c.l.b16 %v914
        %v1120 = vunpack.c.l.b16 %v946
        %v1121 = vunpack.c.l.b16 %v1042
        %v1122 = vunpack.c.l.b16 %v1074
        %v1123 = vld [vmem:[#allocation3] sm:$0xf]
        %v1124 = vld [vmem:[#allocation3 + $0x4] sm:$0xf]
        %v1125 = vld [vmem:[#allocation3 + $0x8] sm:$0xf]
        %v1126 = vld [vmem:[#allocation3 + $0xc] sm:$0xf]
        %v1127 = vld [vmem:[#allocation3 + $0x10] sm:$0xf]
        %v1128 = vld [vmem:[#allocation3 + $0x14] sm:$0xf]
        %v1129 = vld [vmem:[#allocation3 + $0x18] sm:$0xf]
        %v1130 = vld [vmem:[#allocation3 + $0x1c] sm:$0xf]
        %v1131 = vld [vmem:[#allocation3 + $0x20] sm:$0xf]
        %v1132 = vld [vmem:[#allocation3 + $0x24] sm:$0xf]
        %v1133 = vld [vmem:[#allocation3 + $0x28] sm:$0xf]
        %v1134 = vld [vmem:[#allocation3 + $0x2c] sm:$0xf]
        %v1135 = vld [vmem:[#allocation3 + $0x30] sm:$0xf]
        %v1136 = vld [vmem:[#allocation3 + $0x34] sm:$0xf]
        %v1137 = vld [vmem:[#allocation3 + $0x38] sm:$0xf]
        %v1138 = vld [vmem:[#allocation3 + $0x3c] sm:$0xf]
        %v1139 = vld [vmem:[#allocation3 + $0x40] sm:$0xf]
        %v1140 = vld [vmem:[#allocation3 + $0x44] sm:$0xf]
        %v1141 = vld [vmem:[#allocation3 + $0x48] sm:$0xf]
        %v1142 = vld [vmem:[#allocation3 + $0x4c] sm:$0xf]
        %v1143 = vld [vmem:[#allocation3 + $0x50] sm:$0xf]
        %v1144 = vld [vmem:[#allocation3 + $0x54] sm:$0xf]
        %v1145 = vld [vmem:[#allocation3 + $0x58] sm:$0xf]
        %v1146 = vld [vmem:[#allocation3 + $0x5c] sm:$0xf]
        %v1147 = vld [vmem:[#allocation3 + $0x60] sm:$0xf]
        %v1148 = vld [vmem:[#allocation3 + $0x64] sm:$0xf]
        %v1149 = vld [vmem:[#allocation3 + $0x68] sm:$0xf]
        %v1150 = vld [vmem:[#allocation3 + $0x6c] sm:$0xf]
        %v1151 = vld [vmem:[#allocation3 + $0x70] sm:$0xf]
        %v1152 = vld [vmem:[#allocation3 + $0x74] sm:$0xf]
        %v1153 = vld [vmem:[#allocation3 + $0x78] sm:$0xf]
        %v1154 = vld [vmem:[#allocation3 + $0x7c] sm:$0xf]
        %v1155 = vld [vmem:[#allocation3 + $0x80] sm:$0xf]
        %v1156 = vld [vmem:[#allocation3 + $0x84] sm:$0xf]
        %v1157 = vld [vmem:[#allocation3 + $0x88] sm:$0xf]
        %v1158 = vld [vmem:[#allocation3 + $0x8c] sm:$0xf]
        %v1159 = vld [vmem:[#allocation3 + $0x90] sm:$0xf]
        %v1160 = vld [vmem:[#allocation3 + $0x94] sm:$0xf]
        %v1161 = vld [vmem:[#allocation3 + $0x98] sm:$0xf]
        %v1162 = vld [vmem:[#allocation3 + $0x9c] sm:$0xf]
        %v1163 = vld [vmem:[#allocation3 + $0xa0] sm:$0xf]
        %v1164 = vld [vmem:[#allocation3 + $0xa4] sm:$0xf]
        %v1165 = vld [vmem:[#allocation3 + $0xa8] sm:$0xf]
        %v1166 = vld [vmem:[#allocation3 + $0xac] sm:$0xf]
        %v1167 = vld [vmem:[#allocation3 + $0xb0] sm:$0xf]
        %v1168 = vld [vmem:[#allocation3 + $0xb4] sm:$0xf]
        %v1169 = vld [vmem:[#allocation3 + $0xb8] sm:$0xf]
        %v1170 = vld [vmem:[#allocation3 + $0xbc] sm:$0xf]
        %v1171 = vld [vmem:[#allocation3 + $0xc0] sm:$0xf]
        %v1172 = vld [vmem:[#allocation3 + $0xc4] sm:$0xf]
        %v1173 = vld [vmem:[#allocation3 + $0xc8] sm:$0xf]
        %v1174 = vld [vmem:[#allocation3 + $0xcc] sm:$0xf]
        %v1175 = vld [vmem:[#allocation3 + $0xd0] sm:$0xf]
        %v1176 = vld [vmem:[#allocation3 + $0xd4] sm:$0xf]
        %v1177 = vld [vmem:[#allocation3 + $0xd8] sm:$0xf]
        %v1178 = vld [vmem:[#allocation3 + $0xdc] sm:$0xf]
        %v1179 = vld [vmem:[#allocation3 + $0xe0] sm:$0xf]
        %v1180 = vld [vmem:[#allocation3 + $0xe4] sm:$0xf]
        %v1181 = vld [vmem:[#allocation3 + $0xe8] sm:$0xf]
        %v1182 = vld [vmem:[#allocation3 + $0xec] sm:$0xf]
        %v1183 = vld [vmem:[#allocation3 + $0xf0] sm:$0xf]
        %v1184 = vld [vmem:[#allocation3 + $0xf4] sm:$0xf]
        %v1185 = vld [vmem:[#allocation3 + $0xf8] sm:$0xf]
        %v1186 = vld [vmem:[#allocation3 + $0xfc] sm:$0xf]
        %v1187 = vld [vmem:[#allocation3 + $0x100] sm:$0xf]
        %v1188 = vld [vmem:[#allocation3 + $0x104] sm:$0xf]
        %v1189 = vld [vmem:[#allocation3 + $0x108] sm:$0xf]
        %v1190 = vld [vmem:[#allocation3 + $0x10c] sm:$0xf]
        %v1191 = vld [vmem:[#allocation3 + $0x110] sm:$0xf]
        %v1192 = vld [vmem:[#allocation3 + $0x114] sm:$0xf]
        %v1193 = vld [vmem:[#allocation3 + $0x118] sm:$0xf]
        %v1194 = vld [vmem:[#allocation3 + $0x11c] sm:$0xf]
        %v1195 = vld [vmem:[#allocation3 + $0x120] sm:$0xf]
        %v1196 = vld [vmem:[#allocation3 + $0x124] sm:$0xf]
        %v1197 = vld [vmem:[#allocation3 + $0x128] sm:$0xf]
        %v1198 = vld [vmem:[#allocation3 + $0x12c] sm:$0xf]
        %v1199 = vld [vmem:[#allocation3 + $0x130] sm:$0xf]
        %v1200 = vld [vmem:[#allocation3 + $0x134] sm:$0xf]
        %v1201 = vld [vmem:[#allocation3 + $0x138] sm:$0xf]
        %v1202 = vld [vmem:[#allocation3 + $0x13c] sm:$0xf]
        %v1203 = vld [vmem:[#allocation3 + $0x140] sm:$0xf]
        %v1204 = vld [vmem:[#allocation3 + $0x144] sm:$0xf]
        %v1205 = vld [vmem:[#allocation3 + $0x148] sm:$0xf]
        %v1206 = vld [vmem:[#allocation3 + $0x14c] sm:$0xf]
        %v1207 = vld [vmem:[#allocation3 + $0x150] sm:$0xf]
        %v1208 = vld [vmem:[#allocation3 + $0x154] sm:$0xf]
        %v1209 = vld [vmem:[#allocation3 + $0x158] sm:$0xf]
        %v1210 = vld [vmem:[#allocation3 + $0x15c] sm:$0xf]
        %v1211 = vld [vmem:[#allocation3 + $0x160] sm:$0xf]
        %v1212 = vld [vmem:[#allocation3 + $0x164] sm:$0xf]
        %v1213 = vld [vmem:[#allocation3 + $0x168] sm:$0xf]
        %v1214 = vld [vmem:[#allocation3 + $0x16c] sm:$0xf]
        %v1215 = vld [vmem:[#allocation3 + $0x170] sm:$0xf]
        %v1216 = vld [vmem:[#allocation3 + $0x174] sm:$0xf]
        %v1217 = vld [vmem:[#allocation3 + $0x178] sm:$0xf]
        %v1218 = vld [vmem:[#allocation3 + $0x17c] sm:$0xf]
        %v1219 = vld [vmem:[#allocation3 + $0x180] sm:$0xf]
        %v1220 = vld [vmem:[#allocation3 + $0x184] sm:$0xf]
        %v1221 = vld [vmem:[#allocation3 + $0x188] sm:$0xf]
        %v1222 = vld [vmem:[#allocation3 + $0x18c] sm:$0xf]
        %v1223 = vld [vmem:[#allocation3 + $0x190] sm:$0xf]
        %v1224 = vld [vmem:[#allocation3 + $0x194] sm:$0xf]
        %v1225 = vld [vmem:[#allocation3 + $0x198] sm:$0xf]
        %v1226 = vld [vmem:[#allocation3 + $0x19c] sm:$0xf]
        %v1227 = vld [vmem:[#allocation3 + $0x1a0] sm:$0xf]
        %v1228 = vld [vmem:[#allocation3 + $0x1a4] sm:$0xf]
        %v1229 = vld [vmem:[#allocation3 + $0x1a8] sm:$0xf]
        %v1230 = vld [vmem:[#allocation3 + $0x1ac] sm:$0xf]
        %v1231 = vld [vmem:[#allocation3 + $0x1b0] sm:$0xf]
        %v1232 = vld [vmem:[#allocation3 + $0x1b4] sm:$0xf]
        %v1233 = vld [vmem:[#allocation3 + $0x1b8] sm:$0xf]
        %v1234 = vld [vmem:[#allocation3 + $0x1bc] sm:$0xf]
        %v1235 = vld [vmem:[#allocation3 + $0x1c0] sm:$0xf]
        %v1236 = vld [vmem:[#allocation3 + $0x1c4] sm:$0xf]
        %v1237 = vld [vmem:[#allocation3 + $0x1c8] sm:$0xf]
        %v1238 = vld [vmem:[#allocation3 + $0x1cc] sm:$0xf]
        %v1239 = vld [vmem:[#allocation3 + $0x1d0] sm:$0xf]
        %v1240 = vld [vmem:[#allocation3 + $0x1d4] sm:$0xf]
        %v1241 = vld [vmem:[#allocation3 + $0x1d8] sm:$0xf]
        %v1242 = vld [vmem:[#allocation3 + $0x1dc] sm:$0xf]
        %v1243 = vld [vmem:[#allocation3 + $0x1e0] sm:$0xf]
        %v1244 = vld [vmem:[#allocation3 + $0x1e4] sm:$0xf]
        %v1245 = vld [vmem:[#allocation3 + $0x1e8] sm:$0xf]
        %v1246 = vld [vmem:[#allocation3 + $0x1ec] sm:$0xf]
        %v1247 = vld [vmem:[#allocation3 + $0x1f0] sm:$0xf]
        %v1248 = vld [vmem:[#allocation3 + $0x1f4] sm:$0xf]
        %v1249 = vld [vmem:[#allocation3 + $0x1f8] sm:$0xf]
        %v1250 = vld [vmem:[#allocation3 + $0x1fc] sm:$0xf]
        %v1251 = vld [vmem:[#allocation3 + $0x200] sm:$0xf]
        %v1252 = vld [vmem:[#allocation3 + $0x204] sm:$0xf]
        %v1253 = vld [vmem:[#allocation3 + $0x208] sm:$0xf]
        %v1254 = vld [vmem:[#allocation3 + $0x20c] sm:$0xf]
        %v1255 = vld [vmem:[#allocation3 + $0x210] sm:$0xf]
        %v1256 = vld [vmem:[#allocation3 + $0x214] sm:$0xf]
        %v1257 = vld [vmem:[#allocation3 + $0x218] sm:$0xf]
        %v1258 = vld [vmem:[#allocation3 + $0x21c] sm:$0xf]
        %v1259 = vld [vmem:[#allocation3 + $0x220] sm:$0xf]
        %v1260 = vld [vmem:[#allocation3 + $0x224] sm:$0xf]
        %v1261 = vld [vmem:[#allocation3 + $0x228] sm:$0xf]
        %v1262 = vld [vmem:[#allocation3 + $0x22c] sm:$0xf]
        %v1263 = vld [vmem:[#allocation3 + $0x230] sm:$0xf]
        %v1264 = vld [vmem:[#allocation3 + $0x234] sm:$0xf]
        %v1265 = vld [vmem:[#allocation3 + $0x238] sm:$0xf]
        %v1266 = vld [vmem:[#allocation3 + $0x23c] sm:$0xf]
        %v1267 = vld [vmem:[%s4] sm:$0x1]
        %v1269 = vlaneseq
        %v1270 = vshrl.u32 %v1269, 7
        %v1271 = vsub.s32 0, %v1270
        %v1272 = vrot.slane %v1267, %v1271
        %v1274 = vpack.c.b16 %v709, %v707
        %v1275 = vpack.c.b16 %v1081, %v1075
        %v1276 = vpack.c.b16 %v1082, %v1076
        %v1277 = vpack.c.b16 %v837, %v835
        %v1278 = vpack.c.b16 %v1083, %v1077
        %v1279 = vpack.c.b16 %v1084, %v1078
        %v1280 = vpack.c.b16 %v965, %v963
        %v1281 = vpack.c.b16 %v1085, %v1079
        %v1282 = vpack.c.b16 %v1086, %v1080
        %v1283 = vpack.c.b16 %v713, %v711
        %v1284 = vpack.c.b16 %v1093, %v1087
        %v1285 = vpack.c.b16 %v1094, %v1088
        %v1286 = vpack.c.b16 %v841, %v839
        %v1287 = vpack.c.b16 %v1095, %v1089
        %v1288 = vpack.c.b16 %v1096, %v1090
        %v1289 = vpack.c.b16 %v969, %v967
        %v1290 = vpack.c.b16 %v1097, %v1091
        %v1291 = vpack.c.b16 %v1098, %v1092
        %v1292 = vpack.c.b16 %v717, %v715
        %v1293 = vpack.c.b16 %v1105, %v1099
        %v1294 = vpack.c.b16 %v1106, %v1100
        %v1295 = vpack.c.b16 %v845, %v843
        %v1296 = vpack.c.b16 %v1107, %v1101
        %v1297 = vpack.c.b16 %v1108, %v1102
        %v1298 = vpack.c.b16 %v973, %v971
        %v1299 = vpack.c.b16 %v1109, %v1103
        %v1300 = vpack.c.b16 %v1110, %v1104
        %v1301 = vpack.c.b16 %v721, %v719
        %v1302 = vpack.c.b16 %v1117, %v1111
        %v1303 = vpack.c.b16 %v1118, %v1112
        %v1304 = vpack.c.b16 %v849, %v847
        %v1305 = vpack.c.b16 %v1119, %v1113
        %v1306 = vpack.c.b16 %v1120, %v1114
        %v1307 = vpack.c.b16 %v977, %v975
        %v1308 = vpack.c.b16 %v1121, %v1115
        %v1309 = vpack.c.b16 %v1122, %v1116
        %v1490 = vunpack.c.l.b16 %v1123
        %v1491 = vunpack.c.l.b16 %v1124
        %v1492 = vunpack.c.l.b16 %v1125
        %v1493 = vunpack.c.l.b16 %v1126
        %v1494 = vunpack.c.l.b16 %v1127
        %v1495 = vunpack.c.l.b16 %v1128
        %v1496 = vunpack.c.l.b16 %v1129
        %v1497 = vunpack.c.l.b16 %v1130
        %v1498 = vunpack.c.l.b16 %v1131
        %v1499 = vunpack.c.l.b16 %v1132
        %v1500 = vunpack.c.l.b16 %v1133
        %v1501 = vunpack.c.l.b16 %v1134
        %v1502 = vunpack.c.l.b16 %v1135
        %v1503 = vunpack.c.l.b16 %v1136
        %v1504 = vunpack.c.l.b16 %v1137
        %v1505 = vunpack.c.l.b16 %v1138
        %v1506 = vunpack.c.l.b16 %v1139
        %v1507 = vunpack.c.l.b16 %v1140
        %v1508 = vunpack.c.l.b16 %v1141
        %v1509 = vunpack.c.l.b16 %v1142
        %v1510 = vunpack.c.l.b16 %v1143
        %v1511 = vunpack.c.l.b16 %v1144
        %v1512 = vunpack.c.l.b16 %v1145
        %v1513 = vunpack.c.l.b16 %v1146
        %v1514 = vunpack.c.l.b16 %v1147
        %v1515 = vunpack.c.l.b16 %v1148
        %v1516 = vunpack.c.l.b16 %v1149
        %v1517 = vunpack.c.l.b16 %v1150
        %v1518 = vunpack.c.l.b16 %v1151
        %v1519 = vunpack.c.l.b16 %v1152
        %v1520 = vunpack.c.l.b16 %v1153
        %v1521 = vunpack.c.l.b16 %v1154
        %v1522 = vunpack.c.l.b16 %v1155
        %v1523 = vunpack.c.l.b16 %v1156
        %v1524 = vunpack.c.l.b16 %v1157
        %v1525 = vunpack.c.l.b16 %v1158
        %v1526 = vunpack.c.l.b16 %v1159
        %v1527 = vunpack.c.l.b16 %v1160
        %v1528 = vunpack.c.l.b16 %v1161
        %v1529 = vunpack.c.l.b16 %v1162
        %v1530 = vunpack.c.l.b16 %v1163
        %v1531 = vunpack.c.l.b16 %v1164
        %v1532 = vunpack.c.l.b16 %v1165
        %v1533 = vunpack.c.l.b16 %v1166
        %v1534 = vunpack.c.l.b16 %v1167
        %v1535 = vunpack.c.l.b16 %v1168
        %v1536 = vunpack.c.l.b16 %v1169
        %v1537 = vunpack.c.l.b16 %v1170
        %v1538 = vunpack.c.l.b16 %v1171
        %v1539 = vunpack.c.l.b16 %v1172
        %v1540 = vunpack.c.l.b16 %v1173
        %v1541 = vunpack.c.l.b16 %v1174
        %v1542 = vunpack.c.l.b16 %v1175
        %v1543 = vunpack.c.l.b16 %v1176
        %v1544 = vunpack.c.l.b16 %v1177
        %v1545 = vunpack.c.l.b16 %v1178
        %v1546 = vunpack.c.l.b16 %v1179
        %v1547 = vunpack.c.l.b16 %v1180
        %v1548 = vunpack.c.l.b16 %v1181
        %v1549 = vunpack.c.l.b16 %v1182
        %v1550 = vunpack.c.l.b16 %v1183
        %v1551 = vunpack.c.l.b16 %v1184
        %v1552 = vunpack.c.l.b16 %v1185
        %v1553 = vunpack.c.l.b16 %v1186
        %v1554 = vunpack.c.l.b16 %v1187
        %v1555 = vunpack.c.l.b16 %v1188
        %v1556 = vunpack.c.l.b16 %v1189
        %v1557 = vunpack.c.l.b16 %v1190
        %v1558 = vunpack.c.l.b16 %v1191
        %v1559 = vunpack.c.l.b16 %v1192
        %v1560 = vunpack.c.l.b16 %v1193
        %v1561 = vunpack.c.l.b16 %v1194
        %v1562 = vunpack.c.l.b16 %v1195
        %v1563 = vunpack.c.l.b16 %v1196
        %v1564 = vunpack.c.l.b16 %v1197
        %v1565 = vunpack.c.l.b16 %v1198
        %v1566 = vunpack.c.l.b16 %v1199
        %v1567 = vunpack.c.l.b16 %v1200
        %v1568 = vunpack.c.l.b16 %v1201
        %v1569 = vunpack.c.l.b16 %v1202
        %v1570 = vunpack.c.l.b16 %v1203
        %v1571 = vunpack.c.l.b16 %v1204
        %v1572 = vunpack.c.l.b16 %v1205
        %v1573 = vunpack.c.l.b16 %v1206
        %v1574 = vunpack.c.l.b16 %v1207
        %v1575 = vunpack.c.l.b16 %v1208
        %v1576 = vunpack.c.l.b16 %v1209
        %v1577 = vunpack.c.l.b16 %v1210
        %v1578 = vunpack.c.l.b16 %v1211
        %v1579 = vunpack.c.l.b16 %v1212
        %v1580 = vunpack.c.l.b16 %v1213
        %v1581 = vunpack.c.l.b16 %v1214
        %v1582 = vunpack.c.l.b16 %v1215
        %v1583 = vunpack.c.l.b16 %v1216
        %v1584 = vunpack.c.l.b16 %v1217
        %v1585 = vunpack.c.l.b16 %v1218
        %v1586 = vunpack.c.l.b16 %v1219
        %v1587 = vunpack.c.l.b16 %v1220
        %v1588 = vunpack.c.l.b16 %v1221
        %v1589 = vunpack.c.l.b16 %v1222
        %v1590 = vunpack.c.l.b16 %v1223
        %v1591 = vunpack.c.l.b16 %v1224
        %v1592 = vunpack.c.l.b16 %v1225
        %v1593 = vunpack.c.l.b16 %v1226
        %v1594 = vunpack.c.l.b16 %v1227
        %v1595 = vunpack.c.l.b16 %v1228
        %v1596 = vunpack.c.l.b16 %v1229
        %v1597 = vunpack.c.l.b16 %v1230
        %v1598 = vunpack.c.l.b16 %v1231
        %v1599 = vunpack.c.l.b16 %v1232
        %v1600 = vunpack.c.l.b16 %v1233
        %v1601 = vunpack.c.l.b16 %v1234
        %v1602 = vunpack.c.l.b16 %v1235
        %v1603 = vunpack.c.l.b16 %v1236
        %v1604 = vunpack.c.l.b16 %v1237
        %v1605 = vunpack.c.l.b16 %v1238
        %v1606 = vunpack.c.l.b16 %v1239
        %v1607 = vunpack.c.l.b16 %v1240
        %v1608 = vunpack.c.l.b16 %v1241
        %v1609 = vunpack.c.l.b16 %v1242
        %v1610 = vunpack.c.l.b16 %v1243
        %v1611 = vunpack.c.l.b16 %v1244
        %v1612 = vunpack.c.l.b16 %v1245
        %v1613 = vunpack.c.l.b16 %v1246
        %v1614 = vunpack.c.l.b16 %v1247
        %v1615 = vunpack.c.l.b16 %v1248
        %v1616 = vunpack.c.l.b16 %v1249
        %v1617 = vunpack.c.l.b16 %v1250
        %v1618 = vunpack.c.l.b16 %v1251
        %v1619 = vunpack.c.l.b16 %v1252
        %v1620 = vunpack.c.l.b16 %v1253
        %v1621 = vunpack.c.l.b16 %v1254
        %v1622 = vunpack.c.l.b16 %v1255
        %v1623 = vunpack.c.l.b16 %v1256
        %v1624 = vunpack.c.l.b16 %v1257
        %v1625 = vunpack.c.l.b16 %v1258
        %v1626 = vunpack.c.l.b16 %v1259
        %v1627 = vunpack.c.l.b16 %v1260
        %v1628 = vunpack.c.l.b16 %v1261
        %v1629 = vunpack.c.l.b16 %v1262
        %v1630 = vunpack.c.l.b16 %v1263
        %v1631 = vunpack.c.l.b16 %v1264
        %v1632 = vunpack.c.l.b16 %v1265
        %v1633 = vunpack.c.l.b16 %v1266
        %v1634 = vpack.c.b16 %v1491, %v1490
        %v1635 = vpack.c.b16 %v1493, %v1492
        %v1636 = vpack.c.b16 %v1495, %v1494
        %v1637 = vpack.c.b16 %v1497, %v1496
        %v1638 = vpack.c.b16 %v1499, %v1498
        %v1639 = vpack.c.b16 %v1501, %v1500
        %v1640 = vpack.c.b16 %v1503, %v1502
        %v1641 = vpack.c.b16 %v1505, %v1504
        %v1642 = vpack.c.b16 %v1507, %v1506
        %v1643 = vpack.c.b16 %v1509, %v1508
        %v1644 = vpack.c.b16 %v1511, %v1510
        %v1645 = vpack.c.b16 %v1513, %v1512
        %v1646 = vpack.c.b16 %v1515, %v1514
        %v1647 = vpack.c.b16 %v1517, %v1516
        %v1648 = vpack.c.b16 %v1519, %v1518
        %v1649 = vpack.c.b16 %v1521, %v1520
        %v1650 = vpack.c.b16 %v1523, %v1522
        %v1651 = vpack.c.b16 %v1525, %v1524
        %v1652 = vpack.c.b16 %v1527, %v1526
        %v1653 = vpack.c.b16 %v1529, %v1528
        %v1654 = vpack.c.b16 %v1531, %v1530
        %v1655 = vpack.c.b16 %v1533, %v1532
        %v1656 = vpack.c.b16 %v1535, %v1534
        %v1657 = vpack.c.b16 %v1537, %v1536
        %v1658 = vpack.c.b16 %v1539, %v1538
        %v1659 = vpack.c.b16 %v1541, %v1540
        %v1660 = vpack.c.b16 %v1543, %v1542
        %v1661 = vpack.c.b16 %v1545, %v1544
        %v1662 = vpack.c.b16 %v1547, %v1546
        %v1663 = vpack.c.b16 %v1549, %v1548
        %v1664 = vpack.c.b16 %v1551, %v1550
        %v1665 = vpack.c.b16 %v1553, %v1552
        %v1666 = vpack.c.b16 %v1555, %v1554
        %v1667 = vpack.c.b16 %v1557, %v1556
        %v1668 = vpack.c.b16 %v1559, %v1558
        %v1669 = vpack.c.b16 %v1561, %v1560
        %v1670 = vpack.c.b16 %v1563, %v1562
        %v1671 = vpack.c.b16 %v1565, %v1564
        %v1672 = vpack.c.b16 %v1567, %v1566
        %v1673 = vpack.c.b16 %v1569, %v1568
        %v1674 = vpack.c.b16 %v1571, %v1570
        %v1675 = vpack.c.b16 %v1573, %v1572
        %v1676 = vpack.c.b16 %v1575, %v1574
        %v1677 = vpack.c.b16 %v1577, %v1576
        %v1678 = vpack.c.b16 %v1579, %v1578
        %v1679 = vpack.c.b16 %v1581, %v1580
        %v1680 = vpack.c.b16 %v1583, %v1582
        %v1681 = vpack.c.b16 %v1585, %v1584
        %v1682 = vpack.c.b16 %v1587, %v1586
        %v1683 = vpack.c.b16 %v1589, %v1588
        %v1684 = vpack.c.b16 %v1591, %v1590
        %v1685 = vpack.c.b16 %v1593, %v1592
        %v1686 = vpack.c.b16 %v1595, %v1594
        %v1687 = vpack.c.b16 %v1597, %v1596
        %v1688 = vpack.c.b16 %v1599, %v1598
        %v1689 = vpack.c.b16 %v1601, %v1600
        %v1690 = vpack.c.b16 %v1603, %v1602
        %v1691 = vpack.c.b16 %v1605, %v1604
        %v1692 = vpack.c.b16 %v1607, %v1606
        %v1693 = vpack.c.b16 %v1609, %v1608
        %v1694 = vpack.c.b16 %v1611, %v1610
        %v1695 = vpack.c.b16 %v1613, %v1612
        %v1696 = vpack.c.b16 %v1615, %v1614
        %v1697 = vpack.c.b16 %v1617, %v1616
        %v1698 = vpack.c.b16 %v1619, %v1618
        %v1699 = vpack.c.b16 %v1621, %v1620
        %v1700 = vpack.c.b16 %v1623, %v1622
        %v1701 = vpack.c.b16 %v1625, %v1624
        %v1702 = vpack.c.b16 %v1627, %v1626
        %v1703 = vpack.c.b16 %v1629, %v1628
        %v1704 = vpack.c.b16 %v1631, %v1630
        %v1705 = vpack.c.b16 %v1633, %v1632
        %1778 = vmatprep.subr.bf16.mxu0 0
        %1779 = vmatpush1.bf16.msra.mxu0 %v1641
        %1780 = vmatprep.subr.bf16.mxu0 0
        %1781 = vmatpush1.bf16.msra.mxu0 %v1640
        %1782 = vmatprep.subr.bf16.mxu0 0
        %1783 = vmatpush1.bf16.msra.mxu0 %v1639
        %1784 = vmatprep.subr.bf16.mxu0 0
        %1785 = vmatpush1.bf16.msra.mxu0 %v1638
        %1786 = vmatprep.subr.bf16.mxu0 0
        %1787 = vmatpush1.bf16.msra.mxu0 %v1637
        %1788 = vmatprep.subr.bf16.mxu0 0
        %1789 = vmatpush1.bf16.msra.mxu0 %v1636
        %1790 = vmatprep.subr.bf16.mxu0 0
        %1791 = vmatpush1.bf16.msra.mxu0 %v1635
        %1792 = vmatprep.subr.bf16.mxu0 0
        %1793 = vmatpush1.bf16.msra.mxu0 %v1634
        %1794 = vmatprep.subr.bf16.mxu0 0
        %1795 = vmatpush2.bf16.msra.mxu0 %v1649
        %1796 = vmatprep.subr.bf16.mxu0 0
        %1797 = vmatpush2.bf16.msra.mxu0 %v1648
        %1798 = vmatprep.subr.bf16.mxu0 0
        %1799 = vmatpush2.bf16.msra.mxu0 %v1647
        %1800 = vmatprep.subr.bf16.mxu0 0
        %1801 = vmatpush2.bf16.msra.mxu0 %v1646
        %1802 = vmatprep.subr.bf16.mxu0 0
        %1803 = vmatpush2.bf16.msra.mxu0 %v1645
        %1804 = vmatprep.subr.bf16.mxu0 0
        %1805 = vmatpush2.bf16.msra.mxu0 %v1644
        %1806 = vmatprep.subr.bf16.mxu0 0
        %1807 = vmatpush2.bf16.msra.mxu0 %v1643
        %1808 = vmatprep.subr.bf16.mxu0 0
        %1809 = vmatpush2.bf16.msra.mxu0 %v1642
        %1810 = vmatprep.mubr.bf16.mxu0 %v1275
        %1811 = vmatmul.mubr.bf16.gmra.mxu0 %v1274
        %v1812 = vpop.f32.mrf.mxu0
        %v1813 = vadd.f32 %v1272, %v1812
        %v1814 = vpop.f32.mrf.mxu0
        %v1815 = vpop.f32.mrf.mxu0
        %v1816 = vadd.f32 %v1272, %v1815
        %v1817 = vpop.f32.mrf.mxu0
        %1818 = vmatprep.mubr.bf16.mxu0 %v1284
        %1819 = vmatmul.mubr.bf16.gmra.mxu0 %v1283
        %v1820 = vpop.f32.mrf.mxu0
        %v1821 = vadd.f32 %v1272, %v1820
        %v1822 = vpop.f32.mrf.mxu0
        %v1823 = vpop.f32.mrf.mxu0
        %v1824 = vadd.f32 %v1272, %v1823
        %v1825 = vpop.f32.mrf.mxu0
        %1826 = vmatprep.mubr.bf16.mxu0 %v1293
        %1827 = vmatmul.mubr.bf16.gmra.mxu0 %v1292
        %v1828 = vpop.f32.mrf.mxu0
        %v1829 = vadd.f32 %v1272, %v1828
        %v1830 = vpop.f32.mrf.mxu0
        %v1831 = vpop.f32.mrf.mxu0
        %v1832 = vadd.f32 %v1272, %v1831
        %v1833 = vpop.f32.mrf.mxu0
        %1834 = vmatprep.mubr.bf16.mxu0 %v1302
        %1835 = vmatmul.mubr.bf16.gmra.mxu0 %v1301
        %v1836 = vpop.f32.mrf.mxu0
        %v1837 = vadd.f32 %v1272, %v1836
        %v1838 = vpop.f32.mrf.mxu0
        %v1839 = vpop.f32.mrf.mxu0
        %v1840 = vadd.f32 %v1272, %v1839
        %v1841 = vpop.f32.mrf.mxu0
        %1842 = vdwg.mxu0
        %1843 = vmatprep.subr.bf16.mxu0 0
        %1844 = vmatpush1.bf16.msra.mxu0 %v1657
        %1845 = vmatprep.subr.bf16.mxu0 0
        %1846 = vmatpush1.bf16.msra.mxu0 %v1656
        %1847 = vmatprep.subr.bf16.mxu0 0
        %1848 = vmatpush1.bf16.msra.mxu0 %v1655
        %1849 = vmatprep.subr.bf16.mxu0 0
        %1850 = vmatpush1.bf16.msra.mxu0 %v1654
        %1851 = vmatprep.subr.bf16.mxu0 0
        %1852 = vmatpush1.bf16.msra.mxu0 %v1653
        %1853 = vmatprep.subr.bf16.mxu0 0
        %1854 = vmatpush1.bf16.msra.mxu0 %v1652
        %1855 = vmatprep.subr.bf16.mxu0 0
        %1856 = vmatpush1.bf16.msra.mxu0 %v1651
        %1857 = vmatprep.subr.bf16.mxu0 0
        %1858 = vmatpush1.bf16.msra.mxu0 %v1650
        %1859 = vmatprep.subr.bf16.mxu0 0
        %1860 = vmatpush2.bf16.msra.mxu0 %v1665
        %1861 = vmatprep.subr.bf16.mxu0 0
        %1862 = vmatpush2.bf16.msra.mxu0 %v1664
        %1863 = vmatprep.subr.bf16.mxu0 0
        %1864 = vmatpush2.bf16.msra.mxu0 %v1663
        %1865 = vmatprep.subr.bf16.mxu0 0
        %1866 = vmatpush2.bf16.msra.mxu0 %v1662
        %1867 = vmatprep.subr.bf16.mxu0 0
        %1868 = vmatpush2.bf16.msra.mxu0 %v1661
        %1869 = vmatprep.subr.bf16.mxu0 0
        %1870 = vmatpush2.bf16.msra.mxu0 %v1660
        %1871 = vmatprep.subr.bf16.mxu0 0
        %1872 = vmatpush2.bf16.msra.mxu0 %v1659
        %1873 = vmatprep.subr.bf16.mxu0 0
        %1874 = vmatpush2.bf16.msra.mxu0 %v1658
        %1875 = vmatprep.mubr.bf16.mxu0 %v1277
        %1876 = vmatmul.mubr.bf16.gmra.mxu0 %v1276
        %v1877 = vpop.f32.mrf.mxu0
        %v1878 = vadd.f32 %v1813, %v1877
        %v1879 = vpop.f32.mrf.mxu0
        %v1880 = vpop.f32.mrf.mxu0
        %v1881 = vadd.f32 %v1816, %v1880
        %v1882 = vpop.f32.mrf.mxu0
        %1883 = vmatprep.mubr.bf16.mxu0 %v1286
        %1884 = vmatmul.mubr.bf16.gmra.mxu0 %v1285
        %v1885 = vpop.f32.mrf.mxu0
        %v1886 = vadd.f32 %v1821, %v1885
        %v1887 = vpop.f32.mrf.mxu0
        %v1888 = vpop.f32.mrf.mxu0
        %v1889 = vadd.f32 %v1824, %v1888
        %v1890 = vpop.f32.mrf.mxu0
        %1891 = vmatprep.mubr.bf16.mxu0 %v1295
        %1892 = vmatmul.mubr.bf16.gmra.mxu0 %v1294
        %v1893 = vpop.f32.mrf.mxu0
        %v1894 = vadd.f32 %v1829, %v1893
        %v1895 = vpop.f32.mrf.mxu0
        %v1896 = vpop.f32.mrf.mxu0
        %v1897 = vadd.f32 %v1832, %v1896
        %v1898 = vpop.f32.mrf.mxu0
        %1899 = vmatprep.mubr.bf16.mxu0 %v1304
        %1900 = vmatmul.mubr.bf16.gmra.mxu0 %v1303
        %v1901 = vpop.f32.mrf.mxu0
        %v1902 = vadd.f32 %v1837, %v1901
        %v1903 = vpop.f32.mrf.mxu0
        %v1904 = vpop.f32.mrf.mxu0
        %v1905 = vadd.f32 %v1840, %v1904
        %v1906 = vpop.f32.mrf.mxu0
        %1907 = vdwg.mxu0
        %1908 = vmatprep.subr.bf16.mxu0 0
        %1909 = vmatpush1.bf16.msra.mxu0 %v1673
        %1910 = vmatprep.subr.bf16.mxu0 0
        %1911 = vmatpush1.bf16.msra.mxu0 %v1672
        %1912 = vmatprep.subr.bf16.mxu0 0
        %1913 = vmatpush1.bf16.msra.mxu0 %v1671
        %1914 = vmatprep.subr.bf16.mxu0 0
        %1915 = vmatpush1.bf16.msra.mxu0 %v1670
        %1916 = vmatprep.subr.bf16.mxu0 0
        %1917 = vmatpush1.bf16.msra.mxu0 %v1669
        %1918 = vmatprep.subr.bf16.mxu0 0
        %1919 = vmatpush1.bf16.msra.mxu0 %v1668
        %1920 = vmatprep.subr.bf16.mxu0 0
        %1921 = vmatpush1.bf16.msra.mxu0 %v1667
        %1922 = vmatprep.subr.bf16.mxu0 0
        %1923 = vmatpush1.bf16.msra.mxu0 %v1666
        %1924 = vmatprep.subr.bf16.mxu0 0
        %1925 = vmatpush2.bf16.msra.mxu0 %v1681
        %1926 = vmatprep.subr.bf16.mxu0 0
        %1927 = vmatpush2.bf16.msra.mxu0 %v1680
        %1928 = vmatprep.subr.bf16.mxu0 0
        %1929 = vmatpush2.bf16.msra.mxu0 %v1679
        %1930 = vmatprep.subr.bf16.mxu0 0
        %1931 = vmatpush2.bf16.msra.mxu0 %v1678
        %1932 = vmatprep.subr.bf16.mxu0 0
        %1933 = vmatpush2.bf16.msra.mxu0 %v1677
        %1934 = vmatprep.subr.bf16.mxu0 0
        %1935 = vmatpush2.bf16.msra.mxu0 %v1676
        %1936 = vmatprep.subr.bf16.mxu0 0
        %1937 = vmatpush2.bf16.msra.mxu0 %v1675
        %1938 = vmatprep.subr.bf16.mxu0 0
        %1939 = vmatpush2.bf16.msra.mxu0 %v1674
        %1940 = vmatprep.mubr.bf16.mxu0 %v1279
        %1941 = vmatmul.mubr.bf16.gmra.mxu0 %v1278
        %v1942 = vpop.f32.mrf.mxu0
        %v1943 = vadd.f32 %v1878, %v1942
        %v1944 = vpop.f32.mrf.mxu0
        %v1945 = vpop.f32.mrf.mxu0
        %v1946 = vadd.f32 %v1881, %v1945
        %v1947 = vpop.f32.mrf.mxu0
        %1948 = vmatprep.mubr.bf16.mxu0 %v1288
        %1949 = vmatmul.mubr.bf16.gmra.mxu0 %v1287
        %v1950 = vpop.f32.mrf.mxu0
        %v1951 = vadd.f32 %v1886, %v1950
        %v1952 = vpop.f32.mrf.mxu0
        %v1953 = vpop.f32.mrf.mxu0
        %v1954 = vadd.f32 %v1889, %v1953
        %v1955 = vpop.f32.mrf.mxu0
        %1956 = vmatprep.mubr.bf16.mxu0 %v1297
        %1957 = vmatmul.mubr.bf16.gmra.mxu0 %v1296
        %v1958 = vpop.f32.mrf.mxu0
        %v1959 = vadd.f32 %v1894, %v1958
        %v1960 = vpop.f32.mrf.mxu0
        %v1961 = vpop.f32.mrf.mxu0
        %v1962 = vadd.f32 %v1897, %v1961
        %v1963 = vpop.f32.mrf.mxu0
        %1964 = vmatprep.mubr.bf16.mxu0 %v1306
        %1965 = vmatmul.mubr.bf16.gmra.mxu0 %v1305
        %v1966 = vpop.f32.mrf.mxu0
        %v1967 = vadd.f32 %v1902, %v1966
        %v1968 = vpop.f32.mrf.mxu0
        %v1969 = vpop.f32.mrf.mxu0
        %v1970 = vadd.f32 %v1905, %v1969
        %v1971 = vpop.f32.mrf.mxu0
        %1972 = vdwg.mxu0
        %1973 = vmatprep.subr.bf16.mxu0 0
        %1974 = vmatpush1.bf16.msra.mxu0 %v1689
        %1975 = vmatprep.subr.bf16.mxu0 0
        %1976 = vmatpush1.bf16.msra.mxu0 %v1688
        %1977 = vmatprep.subr.bf16.mxu0 0
        %1978 = vmatpush1.bf16.msra.mxu0 %v1687
        %1979 = vmatprep.subr.bf16.mxu0 0
        %1980 = vmatpush1.bf16.msra.mxu0 %v1686
        %1981 = vmatprep.subr.bf16.mxu0 0
        %1982 = vmatpush1.bf16.msra.mxu0 %v1685
        %1983 = vmatprep.subr.bf16.mxu0 0
        %1984 = vmatpush1.bf16.msra.mxu0 %v1684
        %1985 = vmatprep.subr.bf16.mxu0 0
        %1986 = vmatpush1.bf16.msra.mxu0 %v1683
        %1987 = vmatprep.subr.bf16.mxu0 0
        %1988 = vmatpush1.bf16.msra.mxu0 %v1682
        %1989 = vmatprep.subr.bf16.mxu0 0
        %1990 = vmatpush2.bf16.msra.mxu0 %v1697
        %1991 = vmatprep.subr.bf16.mxu0 0
        %1992 = vmatpush2.bf16.msra.mxu0 %v1696
        %1993 = vmatprep.subr.bf16.mxu0 0
        %1994 = vmatpush2.bf16.msra.mxu0 %v1695
        %1995 = vmatprep.subr.bf16.mxu0 0
        %1996 = vmatpush2.bf16.msra.mxu0 %v1694
        %1997 = vmatprep.subr.bf16.mxu0 0
        %1998 = vmatpush2.bf16.msra.mxu0 %v1693
        %1999 = vmatprep.subr.bf16.mxu0 0
        %2000 = vmatpush2.bf16.msra.mxu0 %v1692
        %2001 = vmatprep.subr.bf16.mxu0 0
        %2002 = vmatpush2.bf16.msra.mxu0 %v1691
        %2003 = vmatprep.subr.bf16.mxu0 0
        %2004 = vmatpush2.bf16.msra.mxu0 %v1690
        %2005 = vmatprep.mubr.bf16.mxu0 %v1281
        %2006 = vmatmul.mubr.bf16.gmra.mxu0 %v1280
        %v2007 = vpop.f32.mrf.mxu0
        %v2008 = vadd.f32 %v1943, %v2007
        %v2009 = vpop.f32.mrf.mxu0
        %v2010 = vpop.f32.mrf.mxu0
        %v2011 = vadd.f32 %v1946, %v2010
        %v2012 = vpop.f32.mrf.mxu0
        %2013 = vmatprep.mubr.bf16.mxu0 %v1290
        %2014 = vmatmul.mubr.bf16.gmra.mxu0 %v1289
        %v2015 = vpop.f32.mrf.mxu0
        %v2016 = vadd.f32 %v1951, %v2015
        %v2017 = vpop.f32.mrf.mxu0
        %v2018 = vpop.f32.mrf.mxu0
        %v2019 = vadd.f32 %v1954, %v2018
        %v2020 = vpop.f32.mrf.mxu0
        %2021 = vmatprep.mubr.bf16.mxu0 %v1299
        %2022 = vmatmul.mubr.bf16.gmra.mxu0 %v1298
        %v2023 = vpop.f32.mrf.mxu0
        %v2024 = vadd.f32 %v1959, %v2023
        %v2025 = vpop.f32.mrf.mxu0
        %v2026 = vpop.f32.mrf.mxu0
        %v2027 = vadd.f32 %v1962, %v2026
        %v2028 = vpop.f32.mrf.mxu0
        %2029 = vmatprep.mubr.bf16.mxu0 %v1308
        %2030 = vmatmul.mubr.bf16.gmra.mxu0 %v1307
        %v2031 = vpop.f32.mrf.mxu0
        %v2032 = vadd.f32 %v1967, %v2031
        %v2033 = vpop.f32.mrf.mxu0
        %v2034 = vpop.f32.mrf.mxu0
        %v2035 = vadd.f32 %v1970, %v2034
        %v2036 = vpop.f32.mrf.mxu0
        %2037 = vdwg.mxu0
        %2038 = vmatprep.subr.bf16.mxu0 0
        %2039 = vmatpush1.bf16.msra.mxu0 %v1705
        %2040 = vmatprep.subr.bf16.mxu0 0
        %2041 = vmatpush1.bf16.msra.mxu0 %v1704
        %2042 = vmatprep.subr.bf16.mxu0 0
        %2043 = vmatpush1.bf16.msra.mxu0 %v1703
        %2044 = vmatprep.subr.bf16.mxu0 0
        %2045 = vmatpush1.bf16.msra.mxu0 %v1702
        %2046 = vmatprep.subr.bf16.mxu0 0
        %2047 = vmatpush1.bf16.msra.mxu0 %v1701
        %2048 = vmatprep.subr.bf16.mxu0 0
        %2049 = vmatpush1.bf16.msra.mxu0 %v1700
        %2050 = vmatprep.subr.bf16.mxu0 0
        %2051 = vmatpush1.bf16.msra.mxu0 %v1699
        %2052 = vmatprep.subr.bf16.mxu0 0
        %2053 = vmatpush1.bf16.msra.mxu0 %v1698
        %2054 = vmatprep.subr.bf16.mxu0 0
        %2055 = vmatpush2.bf16.msra.mxu0 0
        %2056 = vmatprep.subr.bf16.mxu0 0
        %2057 = vmatpush2.bf16.msra.mxu0 0
        %2058 = vmatprep.subr.bf16.mxu0 0
        %2059 = vmatpush2.bf16.msra.mxu0 0
        %2060 = vmatprep.subr.bf16.mxu0 0
        %2061 = vmatpush2.bf16.msra.mxu0 0
        %2062 = vmatprep.subr.bf16.mxu0 0
        %2063 = vmatpush2.bf16.msra.mxu0 0
        %2064 = vmatprep.subr.bf16.mxu0 0
        %2065 = vmatpush2.bf16.msra.mxu0 0
        %2066 = vmatprep.subr.bf16.mxu0 0
        %2067 = vmatpush2.bf16.msra.mxu0 0
        %2068 = vmatprep.subr.bf16.mxu0 0
        %2069 = vmatpush2.bf16.msra.mxu0 0
        %2070 = vmatprep.mubr.bf16.mxu0 0
        %2071 = vmatmul.mubr.bf16.gmra.mxu0 %v1282
        %v2072 = vpop.f32.mrf.mxu0
        %v2073 = vadd.f32 %v2008, %v2072
        %v2074 = vpop.f32.mrf.mxu0
        %v2075 = vpop.f32.mrf.mxu0
        %v2076 = vadd.f32 %v2011, %v2075
        %v2077 = vpop.f32.mrf.mxu0
        %2078 = vmatprep.mubr.bf16.mxu0 0
        %2079 = vmatmul.mubr.bf16.gmra.mxu0 %v1291
        %v2080 = vpop.f32.mrf.mxu0
        %v2081 = vadd.f32 %v2016, %v2080
        %v2082 = vpop.f32.mrf.mxu0
        %v2083 = vpop.f32.mrf.mxu0
        %v2084 = vadd.f32 %v2019, %v2083
        %v2085 = vpop.f32.mrf.mxu0
        %2086 = vmatprep.mubr.bf16.mxu0 0
        %2087 = vmatmul.mubr.bf16.gmra.mxu0 %v1300
        %v2088 = vpop.f32.mrf.mxu0
        %v2089 = vadd.f32 %v2024, %v2088
        %v2090 = vpop.f32.mrf.mxu0
        %v2091 = vpop.f32.mrf.mxu0
        %v2092 = vadd.f32 %v2027, %v2091
        %v2093 = vpop.f32.mrf.mxu0
        %2094 = vmatprep.mubr.bf16.mxu0 0
        %2095 = vmatmul.mubr.bf16.gmra.mxu0 %v1309
        %v2096 = vpop.f32.mrf.mxu0
        %v2097 = vadd.f32 %v2032, %v2096
        %v2098 = vpop.f32.mrf.mxu0
        %v2099 = vpop.f32.mrf.mxu0
        %v2100 = vadd.f32 %v2035, %v2099
        %v2101 = vpop.f32.mrf.mxu0
        %2102 = vdwg.mxu0
        %v2103 = vmax.f32 %v2073, 0.0
        %v2104 = vmax.f32 %v2076, 0.0
        %v2105 = vmax.f32 %v2081, 0.0
        %v2106 = vmax.f32 %v2084, 0.0
        %v2107 = vmax.f32 %v2089, 0.0
        %v2108 = vmax.f32 %v2092, 0.0
        %v2109 = vmax.f32 %v2097, 0.0
        %v2110 = vmax.f32 %v2100, 0.0
        %v2111 = vpack.c.bf16 %v2104, %v2103
        %v2112 = vpack.c.bf16 %v2106, %v2105
        %v2113 = vpack.c.bf16 %v2108, %v2107
        %v2114 = vpack.c.bf16 %v2110, %v2109
        %v2115 = vld [vmem:[%s5] sm:$0xf]
        %v2116 = vld [vmem:[%s5 + $0x4] sm:$0xf]
        %v2117 = vld [vmem:[%s5 + $0x8] sm:$0xf]
        %v2118 = vld [vmem:[%s5 + $0xc] sm:$0xf]
        %v2119 = vld [vmem:[%s5 + $0x10] sm:$0xf]
        %v2120 = vld [vmem:[%s5 + $0x14] sm:$0xf]
        %v2121 = vld [vmem:[%s5 + $0x18] sm:$0xf]
        %v2122 = vld [vmem:[%s5 + $0x1c] sm:$0xf]
        %v2123 = vld [vmem:[%s5 + $0x20] sm:$0xf]
        %v2124 = vld [vmem:[%s5 + $0x24] sm:$0xf]
        %v2125 = vld [vmem:[%s5 + $0x28] sm:$0xf]
        %v2126 = vld [vmem:[%s5 + $0x2c] sm:$0xf]
        %v2127 = vld [vmem:[%s5 + $0x30] sm:$0xf]
        %v2128 = vld [vmem:[%s5 + $0x34] sm:$0xf]
        %v2129 = vld [vmem:[%s5 + $0x38] sm:$0xf]
        %v2130 = vld [vmem:[%s5 + $0x3c] sm:$0xf]
        %v2131 = vld [vmem:[%s6] sm:$0x1]
        %v2133 = vlaneseq
        %v2134 = vshrl.u32 %v2133, 7
        %v2135 = vsub.s32 0, %v2134
        %v2136 = vrot.slane %v2131, %v2135
        %v2154 = vunpack.c.l.b16 %v2115
        %v2155 = vunpack.c.l.b16 %v2116
        %v2156 = vunpack.c.l.b16 %v2117
        %v2157 = vunpack.c.l.b16 %v2118
        %v2158 = vunpack.c.l.b16 %v2119
        %v2159 = vunpack.c.l.b16 %v2120
        %v2160 = vunpack.c.l.b16 %v2121
        %v2161 = vunpack.c.l.b16 %v2122
        %v2162 = vunpack.c.l.b16 %v2123
        %v2163 = vunpack.c.l.b16 %v2124
        %v2164 = vunpack.c.l.b16 %v2125
        %v2165 = vunpack.c.l.b16 %v2126
        %v2166 = vunpack.c.l.b16 %v2127
        %v2167 = vunpack.c.l.b16 %v2128
        %v2168 = vunpack.c.l.b16 %v2129
        %v2169 = vunpack.c.l.b16 %v2130
        %v2170 = vpack.c.b16 %v2155, %v2154
        %v2171 = vpack.c.b16 %v2157, %v2156
        %v2172 = vpack.c.b16 %v2159, %v2158
        %v2173 = vpack.c.b16 %v2161, %v2160
        %v2174 = vpack.c.b16 %v2163, %v2162
        %v2175 = vpack.c.b16 %v2165, %v2164
        %v2176 = vpack.c.b16 %v2167, %v2166
        %v2177 = vpack.c.b16 %v2169, %v2168
        %2186 = vmatprep.subr.bf16.mxu0 0
        %2187 = vmatpush1.bf16.msra.mxu0 %v2177
        %2188 = vmatprep.subr.bf16.mxu0 0
        %2189 = vmatpush1.bf16.msra.mxu0 %v2176
        %2190 = vmatprep.subr.bf16.mxu0 0
        %2191 = vmatpush1.bf16.msra.mxu0 %v2175
        %2192 = vmatprep.subr.bf16.mxu0 0
        %2193 = vmatpush1.bf16.msra.mxu0 %v2174
        %2194 = vmatprep.subr.bf16.mxu0 0
        %2195 = vmatpush1.bf16.msra.mxu0 %v2173
        %2196 = vmatprep.subr.bf16.mxu0 0
        %2197 = vmatpush1.bf16.msra.mxu0 %v2172
        %2198 = vmatprep.subr.bf16.mxu0 0
        %2199 = vmatpush1.bf16.msra.mxu0 %v2171
        %2200 = vmatprep.subr.bf16.mxu0 0
        %2201 = vmatpush1.bf16.msra.mxu0 %v2170
        %2202 = vmatprep.subr.bf16.mxu0 0
        %2203 = vmatpush2.bf16.msra.mxu0 0
        %2204 = vmatprep.subr.bf16.mxu0 0
        %2205 = vmatpush2.bf16.msra.mxu0 0
        %2206 = vmatprep.subr.bf16.mxu0 0
        %2207 = vmatpush2.bf16.msra.mxu0 0
        %2208 = vmatprep.subr.bf16.mxu0 0
        %2209 = vmatpush2.bf16.msra.mxu0 0
        %2210 = vmatprep.subr.bf16.mxu0 0
        %2211 = vmatpush2.bf16.msra.mxu0 0
        %2212 = vmatprep.subr.bf16.mxu0 0
        %2213 = vmatpush2.bf16.msra.mxu0 0
        %2214 = vmatprep.subr.bf16.mxu0 0
        %2215 = vmatpush2.bf16.msra.mxu0 0
        %2216 = vmatprep.subr.bf16.mxu0 0
        %2217 = vmatpush2.bf16.msra.mxu0 0
        %2218 = vmatprep.mubr.bf16.mxu0 0
        %2219 = vmatmul.mubr.bf16.gmra.mxu0 %v2111
        %v2220 = vpop.f32.mrf.mxu0
        %v2221 = vadd.f32 %v2136, %v2220
        %v2222 = vpop.f32.mrf.mxu0
        %v2223 = vpop.f32.mrf.mxu0
        %v2224 = vadd.f32 %v2136, %v2223
        %v2225 = vpop.f32.mrf.mxu0
        %2226 = vmatprep.mubr.bf16.mxu0 0
        %2227 = vmatmul.mubr.bf16.gmra.mxu0 %v2112
        %v2228 = vpop.f32.mrf.mxu0
        %v2229 = vadd.f32 %v2136, %v2228
        %v2230 = vpop.f32.mrf.mxu0
        %v2231 = vpop.f32.mrf.mxu0
        %v2232 = vadd.f32 %v2136, %v2231
        %v2233 = vpop.f32.mrf.mxu0
        %2234 = vmatprep.mubr.bf16.mxu0 0
        %2235 = vmatmul.mubr.bf16.gmra.mxu0 %v2113
        %v2236 = vpop.f32.mrf.mxu0
        %v2237 = vadd.f32 %v2136, %v2236
        %v2238 = vpop.f32.mrf.mxu0
        %v2239 = vpop.f32.mrf.mxu0
        %v2240 = vadd.f32 %v2136, %v2239
        %v2241 = vpop.f32.mrf.mxu0
        %2242 = vmatprep.mubr.bf16.mxu0 0
        %2243 = vmatmul.mubr.bf16.gmra.mxu0 %v2114
        %v2244 = vpop.f32.mrf.mxu0
        %v2245 = vadd.f32 %v2136, %v2244
        %v2246 = vpop.f32.mrf.mxu0
        %v2247 = vpop.f32.mrf.mxu0
        %v2248 = vadd.f32 %v2136, %v2247
        %v2249 = vpop.f32.mrf.mxu0
        %2250 = vdwg.mxu0
        %v2251 = vunpack.c.l.bf16 %v293
        %v2252 = vunpack.c.l.bf16 %v294
        %v2253 = vunpack.c.l.bf16 %v295
        %v2254 = vunpack.c.l.bf16 %v296
        %v2255 = vunpack.c.l.bf16 %v297
        %v2256 = vunpack.c.l.bf16 %v298
        %v2257 = vunpack.c.l.bf16 %v299
        %v2258 = vunpack.c.l.bf16 %v300
        %v2259 = vadd.f32 %v2221, %v2251
        %v2260 = vadd.f32 %v2224, %v2252
        %v2261 = vadd.f32 %v2229, %v2253
        %v2262 = vadd.f32 %v2232, %v2254
        %v2263 = vadd.f32 %v2237, %v2255
        %v2264 = vadd.f32 %v2240, %v2256
        %v2265 = vadd.f32 %v2245, %v2257
        %v2266 = vadd.f32 %v2248, %v2258
        %v2267 = vmax.f32 %v2259, 0.0
        %v2268 = vmax.f32 %v2260, 0.0
        %v2269 = vmax.f32 %v2261, 0.0
        %v2270 = vmax.f32 %v2262, 0.0
        %v2271 = vmax.f32 %v2263, 0.0
        %v2272 = vmax.f32 %v2264, 0.0
        %v2273 = vmax.f32 %v2265, 0.0
        %v2274 = vmax.f32 %v2266, 0.0
        %v2275 = vpack.c.bf16 %v2267, %v2267
        %v2276 = vpack.c.bf16 %v2268, %v2268
        %v2277 = vpack.c.bf16 %v2269, %v2269
        %v2278 = vpack.c.bf16 %v2270, %v2270
        %v2279 = vpack.c.bf16 %v2271, %v2271
        %v2280 = vpack.c.bf16 %v2272, %v2272
        %v2281 = vpack.c.bf16 %v2273, %v2273
        %v2282 = vpack.c.bf16 %v2274, %v2274
        %vm2283 = vcmask 257024
        %2284 = vst.msk [vmem:[%s286] sm:$0xf] %vm2283, %v2275
        %2285 = vst.msk [vmem:[%s286 + $0x4] sm:$0xf] %vm2283, %v2276
        %2286 = vst.msk [vmem:[%s286 + $0x8] sm:$0xf] %vm2283, %v2277
        %2287 = vst.msk [vmem:[%s286 + $0xc] sm:$0xf] %vm2283, %v2278
        %2288 = vst.msk [vmem:[%s286 + $0x10] sm:$0xf] %vm2283, %v2279
        %2289 = vst.msk [vmem:[%s286 + $0x14] sm:$0xf] %vm2283, %v2280
        %2290 = vst.msk [vmem:[%s286 + $0x18] sm:$0xf] %vm2283, %v2281
        %2291 = vst.msk [vmem:[%s286 + $0x1c] sm:$0xf] %vm2283, %v2282
        %s2292 = sand.u32 %s182, 1
        %s2293 = scalar_lea.sflag [#allocation5], %s2292
        %s2294 = sand.u32 %s182, 1
        %s2295 = smul.addr %s2294, 32
        %s2296 = scalar_lea.vmem [#allocation6], %s2295
        // Predicated region
        $region53: #{tpu_custom_call.1} parent=47 // pred_check
          %p2297 = pneg %p192
        $region54: #{tpu_custom_call.1} parent=47 // pred_check_branch
          %2299 = sbr.rel (%p2297) target = $region56
        $region55: #{tpu_custom_call.1} parent=47 // pred_region
          %s2301 = ssub.s32 512, 512
          %2302 = vsyncadd %s2293, %s2301
          %s2303 = smul.addr %s22, 8
          %s2304 = smul.addr %s2303, 64
          %s2305 = scalar_lea.hbm %s7, %s2304
          %s2306 = sshll.u32 %s2296, 4
          %s2307 = int_to_ptr.vmem [resolvable:$true] %s2306
          %2312 = dma.vmem_to_hbm [thread:$0]  %s2307, 512, %s2305, %s2293, 64, 64, 4
        $region56: #{tpu_custom_call.1} parent=47 // pred_fallthru
          _
      $region48: #{tpu_custom_call.1} parent=5 // pred_fallthru
        _
      %p2313 = scmp.le.s32.totalorder 2, %s17
      // Predicated region
      $region57: #{tpu_custom_call.1} parent=5 // pred_check
        %p2314 = pneg %p2313
      $region58: #{tpu_custom_call.1} parent=5 // pred_check_branch
        %2316 = sbr.rel (%p2314) target = $region60
      $region59: #{tpu_custom_call.1} parent=5 // pred_region
        %s2317 = ssub.s32 %s17, 2
        // Predicated region
        $region61: #{tpu_custom_call.1} parent=59 // pred_check
          %p2318 = pneg %p198
        $region62: #{tpu_custom_call.1} parent=59 // pred_check_branch
          %2320 = sbr.rel (%p2318) target = $region64
        $region63: #{tpu_custom_call.1} parent=59 // pred_region
          %s2321 = sand.u32 %s183, 1
          %s2322 = scalar_lea.sflag [#allocation5], %s2321
          %s2323 = sand.u32 %s183, 1
          %s2324 = smul.addr %s2323, 32
          %s2325 = scalar_lea.vmem [#allocation6], %s2324
          %2326 = dma.done %s2322, 512
        $region64: #{tpu_custom_call.1} parent=59 // pred_fallthru
          _
      $region60: #{tpu_custom_call.1} parent=5 // pred_fallthru
        _
    $region6: #{tpu_custom_call.1} parent=1 // loop_footer
      %s21 = sadd.s32 1, %s17
    $region7: #{tpu_custom_call.1} parent=1 // loop_footer_branch
      %16 = sbr.rel target = $region3
    $region8: #{tpu_custom_call.1} parent=1 // loop_exit
      _
    %2327 = vsyncpa [#allocation4], 1
    %s2328 = scalar_lea.sflag [#allocation4], 1
    %2329 = vsyncpa %s2328, 1
    %2330 = vsyncpa [#allocation5], 1
    %s2331 = scalar_lea.sflag [#allocation5], 1
    %2332 = vsyncpa %s2331, 1

</llo_original>
